<compile_context>
chip_gen: v5e
topology: v5e:2x2
jax: 0.10.0
libtpu: 0.0.40
codegen_flags: <defaults>
</compile_context>

<pallas_src>
import math
import functools
from dataclasses import dataclass

import numpy as np
import jax
import jax.numpy as jnp
from jax.experimental import pallas as pl
from jax.experimental.pallas import tpu as pltpu


@dataclass
class GPTConfig:
    vocab_size: int = 64
    n_layer: int = 2
    n_head: int = 4
    n_embd: int = 32
    mup_width_mult: float = 1.0


def _ceil_to(n, m):
    return ((n + m - 1) // m) * m


def _l2norm(x, eps=1e-12):
    # F.normalize(x, dim=-1) == x * rsqrt(max(sum(x^2), eps^2))
    ss = jnp.sum(x * x, axis=-1, keepdims=True)
    return x * jax.lax.rsqrt(jnp.maximum(ss, eps * eps))


@functools.lru_cache(maxsize=1)
def _vmem_limit_bytes():
    # Generation-dependent scoped-VMEM limit: use the 128 MiB parts (v5e/v6e) more
    # aggressively, stay well under v7x's 64 MiB physical VMEM.
    try:
        cap = pltpu.get_tpu_info().vmem_capacity_bytes
    except Exception:
        cap = 128 * 1024 * 1024
    if cap <= 64 * 1024 * 1024:
        return 52 * 1024 * 1024
    return 100 * 1024 * 1024


# ----------------------------------------------------------------------------
# Rotary / grouping tables
# ----------------------------------------------------------------------------
def _rope_half(T, head_dim):
    inv_freq = 1.0 / (10000.0 ** (jnp.arange(0, head_dim, 2, dtype=jnp.float32) / head_dim))
    freqs = jnp.outer(jnp.arange(T, dtype=jnp.float32), inv_freq)
    # PyTorch caches cos/sin in bfloat16; mimic that quantization, compute in f32.
    cos = jnp.cos(freqs).astype(jnp.bfloat16).astype(jnp.float32)
    sin = jnp.sin(freqs).astype(jnp.bfloat16).astype(jnp.float32)
    return cos, sin


def rope_group_tables(T, head_dim, G):
    """Tables for G heads grouped along lanes: rot(x) = x*cos_g + (x @ perm_g)*sin_g."""
    d = head_dim // 2
    cos, sin = _rope_half(T, head_dim)
    cosf = jnp.concatenate([cos, cos], axis=-1)          # (T, hd)
    sinf = jnp.concatenate([sin, -sin], axis=-1)         # (T, hd)
    cos_g = jnp.tile(cosf, (1, G))                       # (T, G*hd)
    sin_g = jnp.tile(sinf, (1, G))
    # perm[i, j] = 1 iff i == (j + d) % hd  ->  (x @ perm)[j] == x[(j + d) % hd]
    perm = jnp.roll(jnp.eye(head_dim, dtype=jnp.float32), d, axis=0)
    eye_g = jnp.eye(G, dtype=jnp.float32)
    perm_g = jnp.kron(eye_g, perm)                       # block-diagonal per-head rotation
    gmask = jnp.kron(eye_g, jnp.ones((head_dim, head_dim), jnp.float32))  # per-head sumsq
    # TODO(synk): for ungrouped heads with head_dim >= 128, pltpu.roll(x, hd//2, axis=-1)
    #             would replace the permutation matmul on the otherwise-idle XLU.
    return cos_g, sin_g, perm_g, gmask


# ----------------------------------------------------------------------------
# Pallas kernels
# ----------------------------------------------------------------------------
def _attn_kernel(x_ref, wq_ref, wk_ref, wv_ref, wo_ref,
                 qk_scale_ref, cos_ref, sin_ref, perm_ref, gmask_ref, alpha_ref,
                 o_ref, acc_ref, bias_ref, *, heads_per_group, head_dim):
    hg = pl.program_id(1)                 # head-group index (arbitrary / accumulating axis)
    n_groups = pl.num_programs(1)
    T = x_ref.shape[1]
    hd = head_dim

    @pl.when(hg == 0)
    def _():
        acc_ref[...] = jnp.zeros_like(acc_ref)
        # Causal additive bias built once per batch (not per head / head group).
        row = jax.lax.broadcasted_iota(jnp.int32, (T, T), 0)
        col = jax.lax.broadcasted_iota(jnp.int32, (T, T), 1)
        bias_ref[...] = jnp.where(col <= row, 0.0, -jnp.inf).astype(jnp.float32)

    xb = x_ref[0]                                              # (T, C) bf16
    # Grouped QKV projections: one (T,C)@(C,G*hd) bf16 MXU matmul each, f32 accumulation.
    q = jnp.dot(xb, wq_ref[0], preferred_element_type=jnp.float32)
    k = jnp.dot(xb, wk_ref[0], preferred_element_type=jnp.float32)
    v = jnp.dot(xb, wv_ref[0], preferred_element_type=jnp.float32)

    # Per-head l2norm while staying lane-dense: per-head sum-of-squares broadcast over
    # each head's lanes via a block-diagonal ones mask (exact), then rsqrt (EUP).
    gmask = gmask_ref[...]
    qss = jnp.dot(q * q, gmask, preferred_element_type=jnp.float32)
    kss = jnp.dot(k * k, gmask, preferred_element_type=jnp.float32)
    scale = qk_scale_ref[...]                                  # (1, G*hd)
    # fold the nGPT attention scale sqrt(hd) into the q side (saves a (T,T) multiply)
    qn = q * jax.lax.rsqrt(jnp.maximum(qss, 1e-24)) * (scale * math.sqrt(hd))
    kn = k * jax.lax.rsqrt(jnp.maximum(kss, 1e-24)) * scale

    # Rotary embedding via block-diagonal permutation matmul (exact; no slice/concat).
    cosf = cos_ref[...]
    sinf = sin_ref[...]
    perm = perm_ref[...]
    qr = qn * cosf + jnp.dot(qn, perm, preferred_element_type=jnp.float32) * sinf
    kr = kn * cosf + jnp.dot(kn, perm, preferred_element_type=jnp.float32) * sinf

    bias = bias_ref[...]
    vb = v.astype(jnp.bfloat16)
    wo = wo_ref[0]                                             # (G*hd, C) bf16

    # Per-head causal softmax: only one (T,T) f32 score tile live at a time.
    # TODO(synk): at realistic T replace with a KV-tiled online-softmax (flash) loop
    #             with causal block skipping and a parallel query-tile grid axis.
    y_parts = []
    for g in range(heads_per_group):
        sl = slice(g * hd, (g + 1) * hd)
        s = jnp.dot(qr[:, sl], kr[:, sl].T, preferred_element_type=jnp.float32) + bias
        p = jnp.exp(s - jnp.max(s, axis=-1, keepdims=True))
        p = p * pl.reciprocal(jnp.sum(p, axis=-1, keepdims=True), approx=True)
        y_parts.append(jnp.dot(p.astype(jnp.bfloat16), vb[:, sl],
                               preferred_element_type=jnp.float32))

    # Output projection for this head group, accumulated across head groups.
    if heads_per_group == 1 or head_dim % 128 == 0:
        # lane-aligned: assemble the group context and do one (T,G*hd)@(G*hd,C) matmul
        y = y_parts[0] if heads_per_group == 1 else jnp.concatenate(y_parts, axis=-1)
        acc_ref[...] += jnp.dot(y.astype(jnp.bfloat16), wo,
                                preferred_element_type=jnp.float32)
    else:
        # sub-128 head_dim: avoid lane-unaligned concat; per-head out-proj slices of wo
        # are sublane-aligned (multiples of 8 rows).
        proj = jnp.dot(y_parts[0].astype(jnp.bfloat16), wo[0:hd, :],
                       preferred_element_type=jnp.float32)
        for g in range(1, heads_per_group):
            proj += jnp.dot(y_parts[g].astype(jnp.bfloat16), wo[g * hd:(g + 1) * hd, :],
                            preferred_element_type=jnp.float32)
        acc_ref[...] += proj

    @pl.when(hg == n_groups - 1)
    def _():
        x = x_ref[0].astype(jnp.float32)
        alpha = jnp.abs(alpha_ref[...])                        # (1, C)
        hA = _l2norm(acc_ref[...])
        o_ref[0] = _l2norm(x + alpha * (hA - x)).astype(o_ref.dtype)


def _mlp_kernel(x_ref, wfc_ref, wfc2_ref, uv_ref, wmp_ref, alpha_ref,
                o_ref, acc_ref, *, n_embd):
    f = pl.program_id(1)                  # d_ff tile index (arbitrary / accumulating axis)

    @pl.when(f == 0)
    def _():
        acc_ref[...] = jnp.zeros_like(acc_ref)

    xb = x_ref[...]                                            # (tr, C) bf16
    uv = uv_ref[...]                                           # (2, tf): [u_scale; v_scale]
    x1 = uv[0:1, :] * jnp.dot(xb, wfc_ref[...], preferred_element_type=jnp.float32)
    x2 = (math.sqrt(n_embd) * uv[1:2, :]) * jnp.dot(
        xb, wfc2_ref[...], preferred_element_type=jnp.float32)
    x2 = x2 * jax.nn.sigmoid(x2)                               # SiLU (EUP)
    acc_ref[...] += jnp.dot((x1 * x2).astype(jnp.bfloat16), wmp_ref[...],
                            preferred_element_type=jnp.float32)

    @pl.when(f == pl.num_programs(1) - 1)
    def _():
        x = xb.astype(jnp.float32)
        alpha = jnp.abs(alpha_ref[...])                        # (1, C)
        hM = _l2norm(acc_ref[...])
        o_ref[...] = _l2norm(x + alpha * (hM - x)).astype(o_ref.dtype)


def _head_kernel(x_ref, w_ref, scale_ref, o_ref):
    logits = jnp.dot(x_ref[...], w_ref[...], preferred_element_type=jnp.float32)
    o_ref[...] = scale_ref[...] * logits


# ----------------------------------------------------------------------------
# Wrappers
# ----------------------------------------------------------------------------
def _const_spec(a):
    """Whole-array block whose index never changes; single-buffered (no wasted
    double-buffer VMEM for constants)."""
    return pl.BlockSpec(a.shape, lambda *_: (0,) * a.ndim,
                        pipeline_mode=pl.Buffered(1))


def attn_call(x, lp, tables, cfg):
    """Fused attention sub-block. Grid: (batch [parallel], head_group [arbitrary])."""
    B, T, C = x.shape
    hd = C // cfg.n_head
    HG, _, Ghd = lp['w_q'].shape
    G = Ghd // hd
    cos_g, sin_g, perm_g, gmask = tables
    kernel = functools.partial(_attn_kernel, heads_per_group=G, head_dim=hd)

    hg_in = pl.BlockSpec((1, C, Ghd), lambda b, h: (h, 0, 0))
    in_specs = [
        pl.BlockSpec((1, T, C), lambda b, h: (b, 0, 0)),
        hg_in, hg_in, hg_in,
        pl.BlockSpec((1, Ghd, C), lambda b, h: (h, 0, 0)),
        _const_spec(lp['qk_scale_g']),
        _const_spec(cos_g), _const_spec(sin_g),
        _const_spec(perm_g), _const_spec(gmask),
        _const_spec(lp['attn_alpha']),
    ]
    return pl.pallas_call(
        kernel,
        out_shape=jax.ShapeDtypeStruct((B, T, C), jnp.bfloat16),
        grid=(B, HG),
        in_specs=in_specs,
        out_specs=pl.BlockSpec((1, T, C), lambda b, h: (b, 0, 0)),
        scratch_shapes=[pltpu.VMEM((T, C), jnp.float32),     # out-proj accumulator
                        pltpu.VMEM((T, T), jnp.float32)],    # causal bias (built once)
        compiler_params=pltpu.CompilerParams(
            dimension_semantics=("parallel", "arbitrary"),
            vmem_limit_bytes=_vmem_limit_bytes()),
    )(x, lp['w_q'], lp['w_k'], lp['w_v'], lp['w_o'],
      lp['qk_scale_g'], cos_g, sin_g, perm_g, gmask, lp['attn_alpha'])


def mlp_call(x, lp, cfg):
    """Gated-SiLU MLP streamed over lane-aligned d_ff tiles + residual interpolation.
    Grid: (row_tile [parallel], d_ff_tile [arbitrary / accumulating])."""
    B, T, C = x.shape
    R = B * T
    xr = x.reshape(R, C)
    Fp = lp['w_fc'].shape[1]                                   # padded d_ff (multiple of tf)
    tf = 512 if Fp % 512 == 0 else Fp
    if R % 256 == 0:
        tr = 256
    elif R % 128 == 0:
        tr = 128
    else:
        tr = R
    kernel = functools.partial(_mlp_kernel, n_embd=C)
    out = pl.pallas_call(
        kernel,
        out_shape=jax.ShapeDtypeStruct((R, C), jnp.bfloat16),
        grid=(R // tr, Fp // tf),
        in_specs=[
            pl.BlockSpec((tr, C), lambda r, f: (r, 0)),
            pl.BlockSpec((C, tf), lambda r, f: (0, f)),
            pl.BlockSpec((C, tf), lambda r, f: (0, f)),
            pl.BlockSpec((2, tf), lambda r, f: (0, f)),
            pl.BlockSpec((tf, C), lambda r, f: (f, 0)),
            _const_spec(lp['mlp_alpha']),
        ],
        out_specs=pl.BlockSpec((tr, C), lambda r, f: (r, 0)),
        scratch_shapes=[pltpu.VMEM((tr, C), jnp.float32)],
        compiler_params=pltpu.CompilerParams(
            dimension_semantics=("parallel", "arbitrary"),
            vmem_limit_bytes=_vmem_limit_bytes()),
    )(xr, lp['w_fc'], lp['w_fc2'], lp['uv'], lp['w_mlp_proj'], lp['mlp_alpha'])
    return out.reshape(B, T, C)


def head_call(x_last, kparams):
    """lm_head over a lane-dense zero-padded vocab with large vocab tiles."""
    B, C = x_last.shape
    w = kparams['lm_head_T']                                   # (C, Vp) bf16
    scale = kparams['logits_scale']                            # (1, Vp) f32
    Vp = w.shape[1]
    tv = 2048 if Vp % 2048 == 0 else Vp
    return pl.pallas_call(
        _head_kernel,
        out_shape=jax.ShapeDtypeStruct((B, Vp), jnp.float32),
        grid=(Vp // tv,),
        in_specs=[_const_spec(x_last),
                  pl.BlockSpec((C, tv), lambda j: (0, j)),
                  pl.BlockSpec((1, tv), lambda j: (0, j))],
        out_specs=pl.BlockSpec((B, tv), lambda j: (0, j)),
        compiler_params=pltpu.CompilerParams(
            dimension_semantics=("parallel",),
            vmem_limit_bytes=_vmem_limit_bytes()),
    )(x_last.astype(jnp.bfloat16), w, scale)


def gpt_forward(idx, kparams, cfg):
    """Matches GPT.forward(idx, targets=None, return_logits=True)."""
    B, T = idx.shape
    C, H = cfg.n_embd, cfg.n_head
    hd = C // H
    G = kparams['layers'][0]['w_q'].shape[2] // hd             # heads per group (static)
    x = jnp.take(kparams['wte'], idx, axis=0).astype(jnp.bfloat16)   # embedding (glue)
    tables = rope_group_tables(T, hd, G)                       # constant-folded under jit
    for lp in kparams['layers']:
        x = attn_call(x, lp, tables, cfg)
        x = mlp_call(x, lp, cfg)
    if cfg.mup_width_mult != 1:
        x = x / cfg.mup_width_mult
    x_last = x[:, -1, :]                                       # x[:, [-1], :]
    logits_pad = head_call(x_last, kparams)
    logits = logits_pad[:, :cfg.vocab_size]
    # TODO(synk): cross-entropy loss path (targets != None) not implemented.
    return logits[:, None, :].astype(jnp.float32), None        # (B, 1, V), loss=None


# ----------------------------------------------------------------------------
# Parameter init (mirrors _init_weights + norm_weights + Scalers) and
# one-time conversion to kernel layout (bf16, head-group split, lane padding).
# ----------------------------------------------------------------------------
def init_params(cfg, key):
    C, V, H, L = cfg.n_embd, cfg.vocab_size, cfg.n_head, cfg.n_layer
    hd = C // H
    d_ff = int(8 / 3 * C)
    base_std = 1.0 / math.sqrt(C)
    resid_std = base_std / math.sqrt(2 * L)

    def normal(k, shape, std):
        return std * jax.random.normal(k, shape, dtype=jnp.float32)

    def norm_rows(w):   # F.normalize(w, dim=-1); w is (out, in) like nn.Linear.weight
        return w / jnp.maximum(jnp.linalg.norm(w, axis=-1, keepdims=True), 1e-12)

    def norm_cols(w):   # F.normalize(w, dim=0)  (NORM_FIRST)
        return w / jnp.maximum(jnp.linalg.norm(w, axis=0, keepdims=True), 1e-12)

    keys = iter(jax.random.split(key, 2 + L * 7))
    wte = norm_rows(normal(next(keys), (V, C), 0.02))

    layers = []
    for _ in range(L):
        w_q = norm_rows(normal(next(keys), (C, C), base_std))
        w_k = norm_rows(normal(next(keys), (C, C), base_std))
        w_v = norm_rows(normal(next(keys), (C, C), base_std))
        w_o = norm_cols(normal(next(keys), (C, C), resid_std))
        w_fc = norm_rows(normal(next(keys), (d_ff, C), base_std))
        w_fc2 = norm_rows(normal(next(keys), (d_ff, C), base_std))
        w_mp = norm_cols(normal(next(keys), (C, d_ff), resid_std))
        # Scaler.forward() = scale_param * (init / scale_const) == init at initialization
        layers.append(dict(
            w_q=w_q.T, w_k=w_k.T, w_v=w_v.T, w_o=w_o.T,
            w_fc=w_fc.T, w_fc2=w_fc2.T, w_mlp_proj=w_mp.T,
            qk_scale=jnp.ones((1, hd), jnp.float32),            # init=1
            attn_alpha=jnp.full((1, C), 1.0 / L, jnp.float32),   # init=1/n_layer
            u_scale=jnp.ones((1, d_ff), jnp.float32),            # init=1
            v_scale=jnp.ones((1, d_ff), jnp.float32),            # init=1
            mlp_alpha=jnp.full((1, C), 1.0 / L, jnp.float32),     # init=1/n_layer
        ))

    lm_head = norm_rows(normal(next(keys), (V, C), base_std))
    return dict(wte=wte, layers=layers, lm_head_T=lm_head.T,
                logits_scale=jnp.ones((1, V), jnp.float32))      # logits_scaler init=1


def prepare_params(params, cfg):
    """One-time conversion: head-group weight split (target >=256-wide MXU columns),
    bf16 cast, 128-lane-aligned d_ff padding, lane-dense vocab padding."""
    C, H = cfg.n_embd, cfg.n_head
    hd = C // H
    G = min(H, max(1, 256 // hd))          # heads per group (v5e would also accept 128)
    while H % G != 0:
        G -= 1
    Ghd = G * hd
    HG = H // G

    def heads_in(w):    # (C, C) x@W layout -> (HG, C, Ghd) grouped input projections
        return jnp.transpose(w.reshape(C, HG, Ghd), (1, 0, 2)).astype(jnp.bfloat16)

    def heads_out(w):   # (C, C) -> (HG, Ghd, C) grouped output-projection slices
        return w.reshape(HG, Ghd, C).astype(jnp.bfloat16)

    d_ff = params['layers'][0]['w_fc'].shape[1]
    tf = min(512, _ceil_to(d_ff, 128))     # lane-aligned d_ff streaming tile
    Fp = _ceil_to(d_ff, tf)
    pf = Fp - d_ff                          # zero padding is exact for the gated MLP

    layers = []
    for lp in params['layers']:
        uv = jnp.concatenate([lp['u_scale'], lp['v_scale']], axis=0)   # (2, d_ff)
        layers.append(dict(
            w_q=heads_in(lp['w_q']), w_k=heads_in(lp['w_k']), w_v=heads_in(lp['w_v']),
            w_o=heads_out(lp['w_o']),
            qk_scale_g=jnp.tile(lp['qk_scale'], (1, G)),
            attn_alpha=lp['attn_alpha'],
            w_fc=jnp.pad(lp['w_fc'], ((0, 0), (0, pf))).astype(jnp.bfloat16),
            w_fc2=jnp.pad(lp['w_fc2'], ((0, 0), (0, pf))).astype(jnp.bfloat16),
            w_mlp_proj=jnp.pad(lp['w_mlp_proj'], ((0, pf), (0, 0))).astype(jnp.bfloat16),
            uv=jnp.pad(uv, ((0, 0), (0, pf))),
            mlp_alpha=lp['mlp_alpha'],
        ))

    V = params['lm_head_T'].shape[1]
    tv = min(2048, _ceil_to(V, 128))        # large lane-dense vocab tiles
    Vp = _ceil_to(V, tv)
    lm = jnp.pad(params['lm_head_T'], ((0, 0), (0, Vp - V))).astype(jnp.bfloat16)
    ls = jnp.pad(params['logits_scale'], ((0, 0), (0, Vp - V)))
    return dict(wte=params['wte'], layers=layers, lm_head_T=lm, logits_scale=ls)


# ----------------------------------------------------------------------------
# Pure-JAX (f32) reference for validation
# ----------------------------------------------------------------------------
def ref_forward(idx, params, cfg):
    B, T = idx.shape
    C, H = cfg.n_embd, cfg.n_head
    hd = C // H
    x = jnp.take(params['wte'], idx, axis=0)
    cos, sin = _rope_half(T, hd)
    cosb, sinb = cos[None, :, None, :], sin[None, :, None, :]

    def rope(t):
        d = hd // 2
        t1, t2 = t[..., :d], t[..., d:]
        return jnp.concatenate([t1 * cosb + t2 * sinb, -t1 * sinb + t2 * cosb], axis=-1)

    for lp in params['layers']:
        q = (x @ lp['w_q']).reshape(B, T, H, hd)
        k = (x @ lp['w_k']).reshape(B, T, H, hd)
        v = (x @ lp['w_v']).reshape(B, T, H, hd)
        q = lp['qk_scale'][0] * _l2norm(q)
        k = lp['qk_scale'][0] * _l2norm(k)
        q, k = rope(q), rope(k)
        s = jnp.einsum('bthd,bshd->bhts', q, k) * math.sqrt(hd)
        mask = jnp.tril(jnp.ones((T, T), bool))
        s = jnp.where(mask, s, -jnp.inf)
        p = jax.nn.softmax(s, axis=-1)
        y = jnp.einsum('bhts,bshd->bthd', p, v).reshape(B, T, C)
        hA = _l2norm(y @ lp['w_o'])
        x = _l2norm(x + jnp.abs(lp['attn_alpha'][0]) * (hA - x))
        x1 = lp['u_scale'][0] * (x @ lp['w_fc'])
        x2 = math.sqrt(C) * lp['v_scale'][0] * (x @ lp['w_fc2'])
        x2 = x2 * jax.nn.sigmoid(x2)
        hM = _l2norm((x1 * x2) @ lp['w_mlp_proj'])
        x = _l2norm(x + jnp.abs(lp['mlp_alpha'][0]) * (hM - x))
    x_last = x[:, -1:, :]
    return (params['logits_scale'][0] * (x_last @ params['lm_head_T'])).astype(jnp.float32)


if __name__ == "__main__":
    cfg = GPTConfig(vocab_size=64, n_layer=2, n_head=4, n_embd=32, mup_width_mult=1.0)
    key = jax.random.PRNGKey(0)
    pkey, ikey = jax.random.split(key)
    params = init_params(cfg, pkey)
    kparams = prepare_params(params, cfg)

    B, T = 2, 8
    idx = jax.random.randint(ikey, (B, T), 0, cfg.vocab_size, dtype=jnp.int32)

    fwd = jax.jit(lambda i, p: gpt_forward(i, p, cfg))
    logits, loss = fwd(idx, kparams)
    logits = jax.block_until_ready(logits)

    assert logits.shape == (B, 1, cfg.vocab_size) and logits.dtype == jnp.float32
    assert loss is None
    ref = np.asarray(ref_forward(idx, params, cfg))
    # bf16 MXU inputs, bf16 inter-layer activations, approx softmax reciprocal ->
    # slightly looser tolerance than pure f32.
    np.testing.assert_allclose(np.asarray(logits), ref, rtol=2e-2, atol=2e-2)

    print("KERNEL_OK")
</pallas_src>

<mosaic_0001>
module attributes {stable_mosaic.version = 11 : i64} {
  func.func @_attn_kernel(%arg0: i32, %arg1: i32, %arg2: memref<1x8x32xbf16, #tpu.memory_space<vmem>>, %arg3: memref<1x32x32xbf16, #tpu.memory_space<vmem>>, %arg4: memref<1x32x32xbf16, #tpu.memory_space<vmem>>, %arg5: memref<1x32x32xbf16, #tpu.memory_space<vmem>>, %arg6: memref<1x32x32xbf16, #tpu.memory_space<vmem>>, %arg7: memref<1x32xf32, #tpu.memory_space<vmem>>, %arg8: memref<8x32xf32, #tpu.memory_space<vmem>>, %arg9: memref<8x32xf32, #tpu.memory_space<vmem>>, %arg10: memref<32x32xf32, #tpu.memory_space<vmem>>, %arg11: memref<32x32xf32, #tpu.memory_space<vmem>>, %arg12: memref<1x32xf32, #tpu.memory_space<vmem>>, %arg13: memref<1x8x32xbf16, #tpu.memory_space<vmem>>, %arg14: memref<8x32xf32, #tpu.memory_space<vmem>>, %arg15: memref<8x8xf32, #tpu.memory_space<vmem>>) attributes {dimension_semantics = [#tpu.dimension_semantics<parallel>, #tpu.dimension_semantics<arbitrary>], iteration_bounds = array<i64: 2, 1>, scalar_prefetch = 0 : i64, scratch_operands = 2 : i64, tpu.core_type = #tpu.core_type<tc>, window_params = [{transform_indices = @transform_0, window_bounds = array<i64: 1, 8, 32>}, {transform_indices = @transform_1, window_bounds = array<i64: 1, 32, 32>}, {transform_indices = @transform_2, window_bounds = array<i64: 1, 32, 32>}, {transform_indices = @transform_3, window_bounds = array<i64: 1, 32, 32>}, {transform_indices = @transform_4, window_bounds = array<i64: 1, 32, 32>}, {pipeline_mode = #tpu.pipeline_mode<synchronous>, transform_indices = @transform_5, window_bounds = array<i64: 1, 32>}, {pipeline_mode = #tpu.pipeline_mode<synchronous>, transform_indices = @transform_6, window_bounds = array<i64: 8, 32>}, {pipeline_mode = #tpu.pipeline_mode<synchronous>, transform_indices = @transform_7, window_bounds = array<i64: 8, 32>}, {pipeline_mode = #tpu.pipeline_mode<synchronous>, transform_indices = @transform_8, window_bounds = array<i64: 32, 32>}, {pipeline_mode = #tpu.pipeline_mode<synchronous>, transform_indices = @transform_9, window_bounds = array<i64: 32, 32>}, {pipeline_mode = #tpu.pipeline_mode<synchronous>, transform_indices = @transform_10, window_bounds = array<i64: 1, 32>}, {transform_indices = @transform_11, window_bounds = array<i64: 1, 8, 32>}]} {
    %c0_i32 = arith.constant 0 : i32
    %0 = arith.cmpi eq, %arg1, %c0_i32 : i32
    %1 = arith.extui %0 : i1 to i32
    %c0_i32_0 = arith.constant 0 : i32
    %2 = arith.cmpi ne, %1, %c0_i32_0 : i32
    scf.if %2 {
      %cst_62 = arith.constant 0.000000e+00 : f32
      %142 = vector.broadcast %cst_62 : f32 to vector<8x32xf32>
      %c0_63 = arith.constant 0 : index
      %c0_64 = arith.constant 0 : index
      %143 = vector.load %arg14[%c0_63, %c0_64] : memref<8x32xf32, #tpu.memory_space<vmem>>, vector<8x32xf32>
      tpu.vector_store %arg14[%c0_63, %c0_64], %142 {strides = array<i32>} : memref<8x32xf32, #tpu.memory_space<vmem>>, vector<8x32xf32>,
      %144 = tpu.iota {dimensions = array<i32: 0>} : vector<8x8xi32>
      %145 = tpu.iota {dimensions = array<i32: 1>} : vector<8x8xi32>
      %146 = arith.cmpi sle, %145, %144 : vector<8x8xi32>
      %cst_65 = arith.constant 0.000000e+00 : f32
      %cst_66 = arith.constant 0xFF800000 : f32
      %147 = vector.broadcast %cst_65 : f32 to vector<8x8xf32>
      %148 = vector.broadcast %cst_66 : f32 to vector<8x8xf32>
      %149 = arith.select %146, %147, %148 : vector<8x8xi1>, vector<8x8xf32>
      %c0_67 = arith.constant 0 : index
      %c0_68 = arith.constant 0 : index
      %150 = vector.load %arg15[%c0_67, %c0_68] : memref<8x8xf32, #tpu.memory_space<vmem>>, vector<8x8xf32>
      tpu.vector_store %arg15[%c0_67, %c0_68], %149 {strides = array<i32>} : memref<8x8xf32, #tpu.memory_space<vmem>>, vector<8x8xf32>,
    } else {
    }
    %c0 = arith.constant 0 : index
    %c0_1 = arith.constant 0 : index
    %c0_2 = arith.constant 0 : index
    %3 = vector.load %arg2[%c0, %c0_1, %c0_2] : memref<1x8x32xbf16, #tpu.memory_space<vmem>>, vector<1x8x32xbf16>
    %4 = vector.shape_cast %3 : vector<1x8x32xbf16> to vector<8x32xbf16>
    %c0_3 = arith.constant 0 : index
    %c0_4 = arith.constant 0 : index
    %c0_5 = arith.constant 0 : index
    %5 = vector.load %arg3[%c0_3, %c0_4, %c0_5] : memref<1x32x32xbf16, #tpu.memory_space<vmem>>, vector<1x32x32xbf16>
    %6 = vector.shape_cast %5 : vector<1x32x32xbf16> to vector<32x32xbf16>
    %cst = arith.constant dense<0.000000e+00> : vector<8x32xf32>
    %7 = tpu.matmul %4, %6, %cst {dimension_numbers = #tpu.dot_dimension_numbers<[1], [0], [0], [1], [0, 0, 1, 1], [], []>} : vector<8x32xbf16>, vector<32x32xbf16>, vector<8x32xf32> -> vector<8x32xf32>
    %c0_6 = arith.constant 0 : index
    %c0_7 = arith.constant 0 : index
    %c0_8 = arith.constant 0 : index
    %8 = vector.load %arg4[%c0_6, %c0_7, %c0_8] : memref<1x32x32xbf16, #tpu.memory_space<vmem>>, vector<1x32x32xbf16>
    %9 = vector.shape_cast %8 : vector<1x32x32xbf16> to vector<32x32xbf16>
    %cst_9 = arith.constant dense<0.000000e+00> : vector<8x32xf32>
    %10 = tpu.matmul %4, %9, %cst_9 {dimension_numbers = #tpu.dot_dimension_numbers<[1], [0], [0], [1], [0, 0, 1, 1], [], []>} : vector<8x32xbf16>, vector<32x32xbf16>, vector<8x32xf32> -> vector<8x32xf32>
    %c0_10 = arith.constant 0 : index
    %c0_11 = arith.constant 0 : index
    %c0_12 = arith.constant 0 : index
    %11 = vector.load %arg5[%c0_10, %c0_11, %c0_12] : memref<1x32x32xbf16, #tpu.memory_space<vmem>>, vector<1x32x32xbf16>
    %12 = vector.shape_cast %11 : vector<1x32x32xbf16> to vector<32x32xbf16>
    %cst_13 = arith.constant dense<0.000000e+00> : vector<8x32xf32>
    %13 = tpu.matmul %4, %12, %cst_13 {dimension_numbers = #tpu.dot_dimension_numbers<[1], [0], [0], [1], [0, 0, 1, 1], [], []>} : vector<8x32xbf16>, vector<32x32xbf16>, vector<8x32xf32> -> vector<8x32xf32>
    %c0_14 = arith.constant 0 : index
    %c0_15 = arith.constant 0 : index
    %14 = vector.load %arg11[%c0_14, %c0_15] : memref<32x32xf32, #tpu.memory_space<vmem>>, vector<32x32xf32>
    %15 = arith.mulf %7, %7 : vector<8x32xf32>
    %cst_16 = arith.constant dense<0.000000e+00> : vector<8x32xf32>
    %16 = tpu.matmul %15, %14, %cst_16 {dimension_numbers = #tpu.dot_dimension_numbers<[1], [0], [0], [1], [0, 0, 1, 1], [], []>} : vector<8x32xf32>, vector<32x32xf32>, vector<8x32xf32> -> vector<8x32xf32>
    %17 = arith.mulf %10, %10 : vector<8x32xf32>
    %cst_17 = arith.constant dense<0.000000e+00> : vector<8x32xf32>
    %18 = tpu.matmul %17, %14, %cst_17 {dimension_numbers = #tpu.dot_dimension_numbers<[1], [0], [0], [1], [0, 0, 1, 1], [], []>} : vector<8x32xf32>, vector<32x32xf32>, vector<8x32xf32> -> vector<8x32xf32>
    %c0_18 = arith.constant 0 : index
    %c0_19 = arith.constant 0 : index
    %19 = vector.load %arg7[%c0_18, %c0_19] : memref<1x32xf32, #tpu.memory_space<vmem>>, vector<1x32xf32>
    %cst_20 = arith.constant 1.000000e-24 : f32
    %20 = vector.broadcast %cst_20 : f32 to vector<8x32xf32>
    %21 = arith.maximumf %16, %20 : vector<8x32xf32>
    %22 = math.rsqrt %21 : vector<8x32xf32>
    %23 = arith.mulf %7, %22 : vector<8x32xf32>
    %cst_21 = arith.constant 2.82842708 : f32
    %24 = vector.broadcast %cst_21 : f32 to vector<1x32xf32>
    %25 = arith.mulf %19, %24 : vector<1x32xf32>
    %26 = vector.broadcast %25 : vector<1x32xf32> to vector<8x32xf32>
    %27 = arith.mulf %23, %26 : vector<8x32xf32>
    %cst_22 = arith.constant 1.000000e-24 : f32
    %28 = vector.broadcast %cst_22 : f32 to vector<8x32xf32>
    %29 = arith.maximumf %18, %28 : vector<8x32xf32>
    %30 = math.rsqrt %29 : vector<8x32xf32>
    %31 = arith.mulf %10, %30 : vector<8x32xf32>
    %32 = vector.broadcast %19 : vector<1x32xf32> to vector<8x32xf32>
    %33 = arith.mulf %31, %32 : vector<8x32xf32>
    %c0_23 = arith.constant 0 : index
    %c0_24 = arith.constant 0 : index
    %34 = vector.load %arg8[%c0_23, %c0_24] : memref<8x32xf32, #tpu.memory_space<vmem>>, vector<8x32xf32>
    %c0_25 = arith.constant 0 : index
    %c0_26 = arith.constant 0 : index
    %35 = vector.load %arg9[%c0_25, %c0_26] : memref<8x32xf32, #tpu.memory_space<vmem>>, vector<8x32xf32>
    %c0_27 = arith.constant 0 : index
    %c0_28 = arith.constant 0 : index
    %36 = vector.load %arg10[%c0_27, %c0_28] : memref<32x32xf32, #tpu.memory_space<vmem>>, vector<32x32xf32>
    %37 = arith.mulf %27, %34 : vector<8x32xf32>
    %cst_29 = arith.constant dense<0.000000e+00> : vector<8x32xf32>
    %38 = tpu.matmul %27, %36, %cst_29 {dimension_numbers = #tpu.dot_dimension_numbers<[1], [0], [0], [1], [0, 0, 1, 1], [], []>} : vector<8x32xf32>, vector<32x32xf32>, vector<8x32xf32> -> vector<8x32xf32>
    %39 = arith.mulf %38, %35 : vector<8x32xf32>
    %40 = arith.addf %37, %39 : vector<8x32xf32>
    %41 = arith.mulf %33, %34 : vector<8x32xf32>
    %cst_30 = arith.constant dense<0.000000e+00> : vector<8x32xf32>
    %42 = tpu.matmul %33, %36, %cst_30 {dimension_numbers = #tpu.dot_dimension_numbers<[1], [0], [0], [1], [0, 0, 1, 1], [], []>} : vector<8x32xf32>, vector<32x32xf32>, vector<8x32xf32> -> vector<8x32xf32>
    %43 = arith.mulf %42, %35 : vector<8x32xf32>
    %44 = arith.addf %41, %43 : vector<8x32xf32>
    %c0_31 = arith.constant 0 : index
    %c0_32 = arith.constant 0 : index
    %45 = vector.load %arg15[%c0_31, %c0_32] : memref<8x8xf32, #tpu.memory_space<vmem>>, vector<8x8xf32>
    %46 = arith.truncf %13 : vector<8x32xf32> to vector<8x32xbf16>
    %c0_33 = arith.constant 0 : index
    %c0_34 = arith.constant 0 : index
    %c0_35 = arith.constant 0 : index
    %47 = vector.load %arg6[%c0_33, %c0_34, %c0_35] : memref<1x32x32xbf16, #tpu.memory_space<vmem>>, vector<1x32x32xbf16>
    %48 = vector.shape_cast %47 : vector<1x32x32xbf16> to vector<32x32xbf16>
    %49 = vector.extract_strided_slice %40 {offsets = [0, 0], sizes = [8, 8], strides = [1, 1]} : vector<8x32xf32> to vector<8x8xf32>
    %50 = vector.extract_strided_slice %44 {offsets = [0, 0], sizes = [8, 8], strides = [1, 1]} : vector<8x32xf32> to vector<8x8xf32>
    %51 = tpu.transpose %50, [1, 0] : vector<8x8xf32> -> vector<8x8xf32>
    %cst_36 = arith.constant dense<0.000000e+00> : vector<8x8xf32>
    %52 = tpu.matmul %49, %51, %cst_36 {dimension_numbers = #tpu.dot_dimension_numbers<[1], [0], [0], [1], [0, 0, 1, 1], [], []>} : vector<8x8xf32>, vector<8x8xf32>, vector<8x8xf32> -> vector<8x8xf32>
    %53 = arith.addf %52, %45 : vector<8x8xf32>
    %cst_37 = arith.constant dense<0xFF800000> : vector<8xf32>
    %54 = vector.multi_reduction <maximumf>, %53, %cst_37 [1] : vector<8x8xf32> to vector<8xf32>
    %55 = vector.shape_cast %54 : vector<8xf32> to vector<8x1xf32>
    %56 = vector.broadcast %55 : vector<8x1xf32> to vector<8x8xf32>
    %57 = arith.subf %53, %56 : vector<8x8xf32>
    %58 = math.exp %57 : vector<8x8xf32>
    %cst_38 = arith.constant dense<0.000000e+00> : vector<8xf32>
    %59 = vector.multi_reduction <add>, %58, %cst_38 [1] : vector<8x8xf32> to vector<8xf32>
    %60 = vector.shape_cast %59 : vector<8xf32> to vector<8x1xf32>
    %61 = tpu.reciprocal %60 {approx = true} : vector<8x1xf32> -> vector<8x1xf32>
    %62 = vector.broadcast %61 : vector<8x1xf32> to vector<8x8xf32>
    %63 = arith.mulf %58, %62 : vector<8x8xf32>
    %64 = arith.truncf %63 : vector<8x8xf32> to vector<8x8xbf16>
    %65 = vector.extract_strided_slice %46 {offsets = [0, 0], sizes = [8, 8], strides = [1, 1]} : vector<8x32xbf16> to vector<8x8xbf16>
    %cst_39 = arith.constant dense<0.000000e+00> : vector<8x8xf32>
    %66 = tpu.matmul %64, %65, %cst_39 {dimension_numbers = #tpu.dot_dimension_numbers<[1], [0], [0], [1], [0, 0, 1, 1], [], []>} : vector<8x8xbf16>, vector<8x8xbf16>, vector<8x8xf32> -> vector<8x8xf32>
    %67 = vector.extract_strided_slice %40 {offsets = [0, 8], sizes = [8, 8], strides = [1, 1]} : vector<8x32xf32> to vector<8x8xf32>
    %68 = vector.extract_strided_slice %44 {offsets = [0, 8], sizes = [8, 8], strides = [1, 1]} : vector<8x32xf32> to vector<8x8xf32>
    %69 = tpu.transpose %68, [1, 0] : vector<8x8xf32> -> vector<8x8xf32>
    %cst_40 = arith.constant dense<0.000000e+00> : vector<8x8xf32>
    %70 = tpu.matmul %67, %69, %cst_40 {dimension_numbers = #tpu.dot_dimension_numbers<[1], [0], [0], [1], [0, 0, 1, 1], [], []>} : vector<8x8xf32>, vector<8x8xf32>, vector<8x8xf32> -> vector<8x8xf32>
    %71 = arith.addf %70, %45 : vector<8x8xf32>
    %cst_41 = arith.constant dense<0xFF800000> : vector<8xf32>
    %72 = vector.multi_reduction <maximumf>, %71, %cst_41 [1] : vector<8x8xf32> to vector<8xf32>
    %73 = vector.shape_cast %72 : vector<8xf32> to vector<8x1xf32>
    %74 = vector.broadcast %73 : vector<8x1xf32> to vector<8x8xf32>
    %75 = arith.subf %71, %74 : vector<8x8xf32>
    %76 = math.exp %75 : vector<8x8xf32>
    %cst_42 = arith.constant dense<0.000000e+00> : vector<8xf32>
    %77 = vector.multi_reduction <add>, %76, %cst_42 [1] : vector<8x8xf32> to vector<8xf32>
    %78 = vector.shape_cast %77 : vector<8xf32> to vector<8x1xf32>
    %79 = tpu.reciprocal %78 {approx = true} : vector<8x1xf32> -> vector<8x1xf32>
    %80 = vector.broadcast %79 : vector<8x1xf32> to vector<8x8xf32>
    %81 = arith.mulf %76, %80 : vector<8x8xf32>
    %82 = arith.truncf %81 : vector<8x8xf32> to vector<8x8xbf16>
    %83 = vector.extract_strided_slice %46 {offsets = [0, 8], sizes = [8, 8], strides = [1, 1]} : vector<8x32xbf16> to vector<8x8xbf16>
    %cst_43 = arith.constant dense<0.000000e+00> : vector<8x8xf32>
    %84 = tpu.matmul %82, %83, %cst_43 {dimension_numbers = #tpu.dot_dimension_numbers<[1], [0], [0], [1], [0, 0, 1, 1], [], []>} : vector<8x8xbf16>, vector<8x8xbf16>, vector<8x8xf32> -> vector<8x8xf32>
    %85 = vector.extract_strided_slice %40 {offsets = [0, 16], sizes = [8, 8], strides = [1, 1]} : vector<8x32xf32> to vector<8x8xf32>
    %86 = vector.extract_strided_slice %44 {offsets = [0, 16], sizes = [8, 8], strides = [1, 1]} : vector<8x32xf32> to vector<8x8xf32>
    %87 = tpu.transpose %86, [1, 0] : vector<8x8xf32> -> vector<8x8xf32>
    %cst_44 = arith.constant dense<0.000000e+00> : vector<8x8xf32>
    %88 = tpu.matmul %85, %87, %cst_44 {dimension_numbers = #tpu.dot_dimension_numbers<[1], [0], [0], [1], [0, 0, 1, 1], [], []>} : vector<8x8xf32>, vector<8x8xf32>, vector<8x8xf32> -> vector<8x8xf32>
    %89 = arith.addf %88, %45 : vector<8x8xf32>
    %cst_45 = arith.constant dense<0xFF800000> : vector<8xf32>
    %90 = vector.multi_reduction <maximumf>, %89, %cst_45 [1] : vector<8x8xf32> to vector<8xf32>
    %91 = vector.shape_cast %90 : vector<8xf32> to vector<8x1xf32>
    %92 = vector.broadcast %91 : vector<8x1xf32> to vector<8x8xf32>
    %93 = arith.subf %89, %92 : vector<8x8xf32>
    %94 = math.exp %93 : vector<8x8xf32>
    %cst_46 = arith.constant dense<0.000000e+00> : vector<8xf32>
    %95 = vector.multi_reduction <add>, %94, %cst_46 [1] : vector<8x8xf32> to vector<8xf32>
    %96 = vector.shape_cast %95 : vector<8xf32> to vector<8x1xf32>
    %97 = tpu.reciprocal %96 {approx = true} : vector<8x1xf32> -> vector<8x1xf32>
    %98 = vector.broadcast %97 : vector<8x1xf32> to vector<8x8xf32>
    %99 = arith.mulf %94, %98 : vector<8x8xf32>
    %100 = arith.truncf %99 : vector<8x8xf32> to vector<8x8xbf16>
    %101 = vector.extract_strided_slice %46 {offsets = [0, 16], sizes = [8, 8], strides = [1, 1]} : vector<8x32xbf16> to vector<8x8xbf16>
    %cst_47 = arith.constant dense<0.000000e+00> : vector<8x8xf32>
    %102 = tpu.matmul %100, %101, %cst_47 {dimension_numbers = #tpu.dot_dimension_numbers<[1], [0], [0], [1], [0, 0, 1, 1], [], []>} : vector<8x8xbf16>, vector<8x8xbf16>, vector<8x8xf32> -> vector<8x8xf32>
    %103 = vector.extract_strided_slice %40 {offsets = [0, 24], sizes = [8, 8], strides = [1, 1]} : vector<8x32xf32> to vector<8x8xf32>
    %104 = vector.extract_strided_slice %44 {offsets = [0, 24], sizes = [8, 8], strides = [1, 1]} : vector<8x32xf32> to vector<8x8xf32>
    %105 = tpu.transpose %104, [1, 0] : vector<8x8xf32> -> vector<8x8xf32>
    %cst_48 = arith.constant dense<0.000000e+00> : vector<8x8xf32>
    %106 = tpu.matmul %103, %105, %cst_48 {dimension_numbers = #tpu.dot_dimension_numbers<[1], [0], [0], [1], [0, 0, 1, 1], [], []>} : vector<8x8xf32>, vector<8x8xf32>, vector<8x8xf32> -> vector<8x8xf32>
    %107 = arith.addf %106, %45 : vector<8x8xf32>
    %cst_49 = arith.constant dense<0xFF800000> : vector<8xf32>
    %108 = vector.multi_reduction <maximumf>, %107, %cst_49 [1] : vector<8x8xf32> to vector<8xf32>
    %109 = vector.shape_cast %108 : vector<8xf32> to vector<8x1xf32>
    %110 = vector.broadcast %109 : vector<8x1xf32> to vector<8x8xf32>
    %111 = arith.subf %107, %110 : vector<8x8xf32>
    %112 = math.exp %111 : vector<8x8xf32>
    %cst_50 = arith.constant dense<0.000000e+00> : vector<8xf32>
    %113 = vector.multi_reduction <add>, %112, %cst_50 [1] : vector<8x8xf32> to vector<8xf32>
    %114 = vector.shape_cast %113 : vector<8xf32> to vector<8x1xf32>
    %115 = tpu.reciprocal %114 {approx = true} : vector<8x1xf32> -> vector<8x1xf32>
    %116 = vector.broadcast %115 : vector<8x1xf32> to vector<8x8xf32>
    %117 = arith.mulf %112, %116 : vector<8x8xf32>
    %118 = arith.truncf %117 : vector<8x8xf32> to vector<8x8xbf16>
    %119 = vector.extract_strided_slice %46 {offsets = [0, 24], sizes = [8, 8], strides = [1, 1]} : vector<8x32xbf16> to vector<8x8xbf16>
    %cst_51 = arith.constant dense<0.000000e+00> : vector<8x8xf32>
    %120 = tpu.matmul %118, %119, %cst_51 {dimension_numbers = #tpu.dot_dimension_numbers<[1], [0], [0], [1], [0, 0, 1, 1], [], []>} : vector<8x8xbf16>, vector<8x8xbf16>, vector<8x8xf32> -> vector<8x8xf32>
    %121 = arith.truncf %66 : vector<8x8xf32> to vector<8x8xbf16>
    %122 = vector.extract_strided_slice %48 {offsets = [0, 0], sizes = [8, 32], strides = [1, 1]} : vector<32x32xbf16> to vector<8x32xbf16>
    %cst_52 = arith.constant dense<0.000000e+00> : vector<8x32xf32>
    %123 = tpu.matmul %121, %122, %cst_52 {dimension_numbers = #tpu.dot_dimension_numbers<[1], [0], [0], [1], [0, 0, 1, 1], [], []>} : vector<8x8xbf16>, vector<8x32xbf16>, vector<8x32xf32> -> vector<8x32xf32>
    %124 = arith.truncf %84 : vector<8x8xf32> to vector<8x8xbf16>
    %125 = vector.extract_strided_slice %48 {offsets = [8, 0], sizes = [8, 32], strides = [1, 1]} : vector<32x32xbf16> to vector<8x32xbf16>
    %cst_53 = arith.constant dense<0.000000e+00> : vector<8x32xf32>
    %126 = tpu.matmul %124, %125, %cst_53 {dimension_numbers = #tpu.dot_dimension_numbers<[1], [0], [0], [1], [0, 0, 1, 1], [], []>} : vector<8x8xbf16>, vector<8x32xbf16>, vector<8x32xf32> -> vector<8x32xf32>
    %127 = arith.addf %123, %126 : vector<8x32xf32>
    %128 = arith.truncf %102 : vector<8x8xf32> to vector<8x8xbf16>
    %129 = vector.extract_strided_slice %48 {offsets = [16, 0], sizes = [8, 32], strides = [1, 1]} : vector<32x32xbf16> to vector<8x32xbf16>
    %cst_54 = arith.constant dense<0.000000e+00> : vector<8x32xf32>
    %130 = tpu.matmul %128, %129, %cst_54 {dimension_numbers = #tpu.dot_dimension_numbers<[1], [0], [0], [1], [0, 0, 1, 1], [], []>} : vector<8x8xbf16>, vector<8x32xbf16>, vector<8x32xf32> -> vector<8x32xf32>
    %131 = arith.addf %127, %130 : vector<8x32xf32>
    %132 = arith.truncf %120 : vector<8x8xf32> to vector<8x8xbf16>
    %133 = vector.extract_strided_slice %48 {offsets = [24, 0], sizes = [8, 32], strides = [1, 1]} : vector<32x32xbf16> to vector<8x32xbf16>
    %cst_55 = arith.constant dense<0.000000e+00> : vector<8x32xf32>
    %134 = tpu.matmul %132, %133, %cst_55 {dimension_numbers = #tpu.dot_dimension_numbers<[1], [0], [0], [1], [0, 0, 1, 1], [], []>} : vector<8x8xbf16>, vector<8x32xbf16>, vector<8x32xf32> -> vector<8x32xf32>
    %135 = arith.addf %131, %134 : vector<8x32xf32>
    %c0_56 = arith.constant 0 : index
    %c0_57 = arith.constant 0 : index
    %136 = vector.load %arg14[%c0_56, %c0_57] : memref<8x32xf32, #tpu.memory_space<vmem>>, vector<8x32xf32>
    %137 = arith.addf %136, %135 : vector<8x32xf32>
    %c0_58 = arith.constant 0 : index
    %c0_59 = arith.constant 0 : index
    %138 = vector.load %arg14[%c0_58, %c0_59] : memref<8x32xf32, #tpu.memory_space<vmem>>, vector<8x32xf32>
    tpu.vector_store %arg14[%c0_58, %c0_59], %137 {strides = array<i32>} : memref<8x32xf32, #tpu.memory_space<vmem>>, vector<8x32xf32>,
    %c0_i32_60 = arith.constant 0 : i32
    %139 = arith.cmpi eq, %arg1, %c0_i32_60 : i32
    %140 = arith.extui %139 : i1 to i32
    %c0_i32_61 = arith.constant 0 : i32
    %141 = arith.cmpi ne, %140, %c0_i32_61 : i32
    scf.if %141 {
      %c0_62 = arith.constant 0 : index
      %c0_63 = arith.constant 0 : index
      %c0_64 = arith.constant 0 : index
      %142 = vector.load %arg2[%c0_62, %c0_63, %c0_64] : memref<1x8x32xbf16, #tpu.memory_space<vmem>>, vector<1x8x32xbf16>
      %143 = vector.shape_cast %142 : vector<1x8x32xbf16> to vector<8x32xbf16>
      %144 = arith.extf %143 : vector<8x32xbf16> to vector<8x32xf32>
      %c0_65 = arith.constant 0 : index
      %c0_66 = arith.constant 0 : index
      %145 = vector.load %arg12[%c0_65, %c0_66] : memref<1x32xf32, #tpu.memory_space<vmem>>, vector<1x32xf32>
      %146 = math.absf %145 : vector<1x32xf32>
      %c0_67 = arith.constant 0 : index
      %c0_68 = arith.constant 0 : index
      %147 = vector.load %arg14[%c0_67, %c0_68] : memref<8x32xf32, #tpu.memory_space<vmem>>, vector<8x32xf32>
      %148 = arith.mulf %147, %147 : vector<8x32xf32>
      %cst_69 = arith.constant dense<0.000000e+00> : vector<8xf32>
      %149 = vector.multi_reduction <add>, %148, %cst_69 [1] : vector<8x32xf32> to vector<8xf32>
      %150 = vector.shape_cast %149 : vector<8xf32> to vector<8x1xf32>
      %cst_70 = arith.constant 1.000000e-24 : f32
      %151 = vector.broadcast %cst_70 : f32 to vector<8x1xf32>
      %152 = arith.maximumf %150, %151 : vector<8x1xf32>
      %153 = math.rsqrt %152 : vector<8x1xf32>
      %154 = vector.broadcast %153 : vector<8x1xf32> to vector<8x32xf32>
      %155 = arith.mulf %147, %154 : vector<8x32xf32>
      %156 = arith.subf %155, %144 : vector<8x32xf32>
      %157 = vector.broadcast %146 : vector<1x32xf32> to vector<8x32xf32>
      %158 = arith.mulf %157, %156 : vector<8x32xf32>
      %159 = arith.addf %144, %158 : vector<8x32xf32>
      %160 = arith.mulf %159, %159 : vector<8x32xf32>
      %cst_71 = arith.constant dense<0.000000e+00> : vector<8xf32>
      %161 = vector.multi_reduction <add>, %160, %cst_71 [1] : vector<8x32xf32> to vector<8xf32>
      %162 = vector.shape_cast %161 : vector<8xf32> to vector<8x1xf32>
      %cst_72 = arith.constant 1.000000e-24 : f32
      %163 = vector.broadcast %cst_72 : f32 to vector<8x1xf32>
      %164 = arith.maximumf %162, %163 : vector<8x1xf32>
      %165 = math.rsqrt %164 : vector<8x1xf32>
      %166 = vector.broadcast %165 : vector<8x1xf32> to vector<8x32xf32>
      %167 = arith.mulf %159, %166 : vector<8x32xf32>
      %168 = arith.truncf %167 : vector<8x32xf32> to vector<8x32xbf16>
      %c0_73 = arith.constant 0 : index
      %c0_74 = arith.constant 0 : index
      %c0_75 = arith.constant 0 : index
      %169 = vector.load %arg13[%c0_73, %c0_74, %c0_75] : memref<1x8x32xbf16, #tpu.memory_space<vmem>>, vector<1x8x32xbf16>
      %170 = vector.shape_cast %169 : vector<1x8x32xbf16> to vector<8x32xbf16>
      %171 = vector.shape_cast %168 : vector<8x32xbf16> to vector<1x8x32xbf16>
      tpu.vector_store %arg13[%c0_73, %c0_74, %c0_75], %171 {strides = array<i32>} : memref<1x8x32xbf16, #tpu.memory_space<vmem>>, vector<1x8x32xbf16>,
    } else {
    }
    return
  }
  func.func @transform_0(%arg0: i32, %arg1: i32) -> (i32, i32, i32) {
    %c0_i32 = arith.constant 0 : i32
    %c0_i32_0 = arith.constant 0 : i32
    %c0_i32_1 = arith.constant 0 : i32
    return %arg0, %c0_i32, %c0_i32_0 : i32, i32, i32
  }
  func.func @transform_1(%arg0: i32, %arg1: i32) -> (i32, i32, i32) {
    %c0_i32 = arith.constant 0 : i32
    %c0_i32_0 = arith.constant 0 : i32
    %c0_i32_1 = arith.constant 0 : i32
    return %arg1, %c0_i32, %c0_i32_0 : i32, i32, i32
  }
  func.func @transform_2(%arg0: i32, %arg1: i32) -> (i32, i32, i32) {
    %c0_i32 = arith.constant 0 : i32
    %c0_i32_0 = arith.constant 0 : i32
    %c0_i32_1 = arith.constant 0 : i32
    return %arg1, %c0_i32, %c0_i32_0 : i32, i32, i32
  }
  func.func @transform_3(%arg0: i32, %arg1: i32) -> (i32, i32, i32) {
    %c0_i32 = arith.constant 0 : i32
    %c0_i32_0 = arith.constant 0 : i32
    %c0_i32_1 = arith.constant 0 : i32
    return %arg1, %c0_i32, %c0_i32_0 : i32, i32, i32
  }
  func.func @transform_4(%arg0: i32, %arg1: i32) -> (i32, i32, i32) {
    %c0_i32 = arith.constant 0 : i32
    %c0_i32_0 = arith.constant 0 : i32
    %c0_i32_1 = arith.constant 0 : i32
    return %arg1, %c0_i32, %c0_i32_0 : i32, i32, i32
  }
  func.func @transform_5(%arg0: i32, %arg1: i32) -> (i32, i32) {
    %c0_i32 = arith.constant 0 : i32
    %c0_i32_0 = arith.constant 0 : i32
    %c0_i32_1 = arith.constant 0 : i32
    return %c0_i32, %c0_i32_0 : i32, i32
  }
  func.func @transform_6(%arg0: i32, %arg1: i32) -> (i32, i32) {
    %c0_i32 = arith.constant 0 : i32
    %c0_i32_0 = arith.constant 0 : i32
    %c0_i32_1 = arith.constant 0 : i32
    return %c0_i32, %c0_i32_0 : i32, i32
  }
  func.func @transform_7(%arg0: i32, %arg1: i32) -> (i32, i32) {
    %c0_i32 = arith.constant 0 : i32
    %c0_i32_0 = arith.constant 0 : i32
    %c0_i32_1 = arith.constant 0 : i32
    return %c0_i32, %c0_i32_0 : i32, i32
  }
  func.func @transform_8(%arg0: i32, %arg1: i32) -> (i32, i32) {
    %c0_i32 = arith.constant 0 : i32
    %c0_i32_0 = arith.constant 0 : i32
    %c0_i32_1 = arith.constant 0 : i32
    return %c0_i32, %c0_i32_0 : i32, i32
  }
  func.func @transform_9(%arg0: i32, %arg1: i32) -> (i32, i32) {
    %c0_i32 = arith.constant 0 : i32
    %c0_i32_0 = arith.constant 0 : i32
    %c0_i32_1 = arith.constant 0 : i32
    return %c0_i32, %c0_i32_0 : i32, i32
  }
  func.func @transform_10(%arg0: i32, %arg1: i32) -> (i32, i32) {
    %c0_i32 = arith.constant 0 : i32
    %c0_i32_0 = arith.constant 0 : i32
    %c0_i32_1 = arith.constant 0 : i32
    return %c0_i32, %c0_i32_0 : i32, i32
  }
  func.func @transform_11(%arg0: i32, %arg1: i32) -> (i32, i32, i32) {
    %c0_i32 = arith.constant 0 : i32
    %c0_i32_0 = arith.constant 0 : i32
    %c0_i32_1 = arith.constant 0 : i32
    return %arg0, %c0_i32, %c0_i32_0 : i32, i32, i32
  }
}

module attributes {stable_mosaic.version = 11 : i64} {
  func.func @_mlp_kernel(%arg0: i32, %arg1: i32, %arg2: memref<16x32xbf16, #tpu.memory_space<vmem>>, %arg3: memref<32x128xbf16, #tpu.memory_space<vmem>>, %arg4: memref<32x128xbf16, #tpu.memory_space<vmem>>, %arg5: memref<2x128xf32, #tpu.memory_space<vmem>>, %arg6: memref<128x32xbf16, #tpu.memory_space<vmem>>, %arg7: memref<1x32xf32, #tpu.memory_space<vmem>>, %arg8: memref<16x32xbf16, #tpu.memory_space<vmem>>, %arg9: memref<16x32xf32, #tpu.memory_space<vmem>>) attributes {dimension_semantics = [#tpu.dimension_semantics<parallel>, #tpu.dimension_semantics<arbitrary>], iteration_bounds = array<i64: 1, 1>, scalar_prefetch = 0 : i64, scratch_operands = 1 : i64, tpu.core_type = #tpu.core_type<tc>, window_params = [{transform_indices = @transform_0, window_bounds = array<i64: 16, 32>}, {transform_indices = @transform_1, window_bounds = array<i64: 32, 128>}, {transform_indices = @transform_2, window_bounds = array<i64: 32, 128>}, {transform_indices = @transform_3, window_bounds = array<i64: 2, 128>}, {transform_indices = @transform_4, window_bounds = array<i64: 128, 32>}, {pipeline_mode = #tpu.pipeline_mode<synchronous>, transform_indices = @transform_5, window_bounds = array<i64: 1, 32>}, {transform_indices = @transform_6, window_bounds = array<i64: 16, 32>}]} {
    %c0_i32 = arith.constant 0 : i32
    %0 = arith.cmpi eq, %arg1, %c0_i32 : i32
    %1 = arith.extui %0 : i1 to i32
    %c0_i32_0 = arith.constant 0 : i32
    %2 = arith.cmpi ne, %1, %c0_i32_0 : i32
    scf.if %2 {
      %cst_20 = arith.constant 0.000000e+00 : f32
      %33 = vector.broadcast %cst_20 : f32 to vector<16x32xf32>
      %c0_21 = arith.constant 0 : index
      %c0_22 = arith.constant 0 : index
      %34 = vector.load %arg9[%c0_21, %c0_22] : memref<16x32xf32, #tpu.memory_space<vmem>>, vector<16x32xf32>
      tpu.vector_store %arg9[%c0_21, %c0_22], %33 {strides = array<i32>} : memref<16x32xf32, #tpu.memory_space<vmem>>, vector<16x32xf32>,
    } else {
    }
    %c0 = arith.constant 0 : index
    %c0_1 = arith.constant 0 : index
    %3 = vector.load %arg2[%c0, %c0_1] : memref<16x32xbf16, #tpu.memory_space<vmem>>, vector<16x32xbf16>
    %c0_2 = arith.constant 0 : index
    %c0_3 = arith.constant 0 : index
    %4 = vector.load %arg5[%c0_2, %c0_3] : memref<2x128xf32, #tpu.memory_space<vmem>>, vector<2x128xf32>
    %5 = vector.extract_strided_slice %4 {offsets = [0, 0], sizes = [1, 128], strides = [1, 1]} : vector<2x128xf32> to vector<1x128xf32>
    %c0_4 = arith.constant 0 : index
    %c0_5 = arith.constant 0 : index
    %6 = vector.load %arg3[%c0_4, %c0_5] : memref<32x128xbf16, #tpu.memory_space<vmem>>, vector<32x128xbf16>
    %cst = arith.constant dense<0.000000e+00> : vector<16x128xf32>
    %7 = tpu.matmul %3, %6, %cst {dimension_numbers = #tpu.dot_dimension_numbers<[1], [0], [0], [1], [0, 0, 1, 1], [], []>} : vector<16x32xbf16>, vector<32x128xbf16>, vector<16x128xf32> -> vector<16x128xf32>
    %8 = vector.broadcast %5 : vector<1x128xf32> to vector<16x128xf32>
    %9 = arith.mulf %8, %7 : vector<16x128xf32>
    %10 = vector.extract_strided_slice %4 {offsets = [1, 0], sizes = [1, 128], strides = [1, 1]} : vector<2x128xf32> to vector<1x128xf32>
    %cst_6 = arith.constant 5.65685415 : f32
    %11 = vector.broadcast %cst_6 : f32 to vector<1x128xf32>
    %12 = arith.mulf %11, %10 : vector<1x128xf32>
    %c0_7 = arith.constant 0 : index
    %c0_8 = arith.constant 0 : index
    %13 = vector.load %arg4[%c0_7, %c0_8] : memref<32x128xbf16, #tpu.memory_space<vmem>>, vector<32x128xbf16>
    %cst_9 = arith.constant dense<0.000000e+00> : vector<16x128xf32>
    %14 = tpu.matmul %3, %13, %cst_9 {dimension_numbers = #tpu.dot_dimension_numbers<[1], [0], [0], [1], [0, 0, 1, 1], [], []>} : vector<16x32xbf16>, vector<32x128xbf16>, vector<16x128xf32> -> vector<16x128xf32>
    %15 = vector.broadcast %12 : vector<1x128xf32> to vector<16x128xf32>
    %16 = arith.mulf %15, %14 : vector<16x128xf32>
    %17 = arith.negf %16 : vector<16x128xf32>
    %18 = math.exp %17 : vector<16x128xf32>
    %cst_10 = arith.constant 1.000000e+00 : f32
    %19 = vector.broadcast %cst_10 : f32 to vector<16x128xf32>
    %20 = arith.addf %19, %18 : vector<16x128xf32>
    %21 = arith.divf %19, %20 : vector<16x128xf32>
    %22 = arith.mulf %16, %21 : vector<16x128xf32>
    %c0_11 = arith.constant 0 : index
    %c0_12 = arith.constant 0 : index
    %23 = vector.load %arg9[%c0_11, %c0_12] : memref<16x32xf32, #tpu.memory_space<vmem>>, vector<16x32xf32>
    %24 = arith.mulf %9, %22 : vector<16x128xf32>
    %25 = arith.truncf %24 : vector<16x128xf32> to vector<16x128xbf16>
    %c0_13 = arith.constant 0 : index
    %c0_14 = arith.constant 0 : index
    %26 = vector.load %arg6[%c0_13, %c0_14] : memref<128x32xbf16, #tpu.memory_space<vmem>>, vector<128x32xbf16>
    %cst_15 = arith.constant dense<0.000000e+00> : vector<16x32xf32>
    %27 = tpu.matmul %25, %26, %cst_15 {dimension_numbers = #tpu.dot_dimension_numbers<[1], [0], [0], [1], [0, 0, 1, 1], [], []>} : vector<16x128xbf16>, vector<128x32xbf16>, vector<16x32xf32> -> vector<16x32xf32>
    %28 = arith.addf %23, %27 : vector<16x32xf32>
    %c0_16 = arith.constant 0 : index
    %c0_17 = arith.constant 0 : index
    %29 = vector.load %arg9[%c0_16, %c0_17] : memref<16x32xf32, #tpu.memory_space<vmem>>, vector<16x32xf32>
    tpu.vector_store %arg9[%c0_16, %c0_17], %28 {strides = array<i32>} : memref<16x32xf32, #tpu.memory_space<vmem>>, vector<16x32xf32>,
    %c0_i32_18 = arith.constant 0 : i32
    %30 = arith.cmpi eq, %arg1, %c0_i32_18 : i32
    %31 = arith.extui %30 : i1 to i32
    %c0_i32_19 = arith.constant 0 : i32
    %32 = arith.cmpi ne, %31, %c0_i32_19 : i32
    scf.if %32 {
      %33 = arith.extf %3 : vector<16x32xbf16> to vector<16x32xf32>
      %c0_20 = arith.constant 0 : index
      %c0_21 = arith.constant 0 : index
      %34 = vector.load %arg7[%c0_20, %c0_21] : memref<1x32xf32, #tpu.memory_space<vmem>>, vector<1x32xf32>
      %35 = math.absf %34 : vector<1x32xf32>
      %c0_22 = arith.constant 0 : index
      %c0_23 = arith.constant 0 : index
      %36 = vector.load %arg9[%c0_22, %c0_23] : memref<16x32xf32, #tpu.memory_space<vmem>>, vector<16x32xf32>
      %37 = arith.mulf %36, %36 : vector<16x32xf32>
      %cst_24 = arith.constant dense<0.000000e+00> : vector<16xf32>
      %38 = vector.multi_reduction <add>, %37, %cst_24 [1] : vector<16x32xf32> to vector<16xf32>
      %39 = vector.shape_cast %38 : vector<16xf32> to vector<16x1xf32>
      %cst_25 = arith.constant 1.000000e-24 : f32
      %40 = vector.broadcast %cst_25 : f32 to vector<16x1xf32>
      %41 = arith.maximumf %39, %40 : vector<16x1xf32>
      %42 = math.rsqrt %41 : vector<16x1xf32>
      %43 = vector.broadcast %42 : vector<16x1xf32> to vector<16x32xf32>
      %44 = arith.mulf %36, %43 : vector<16x32xf32>
      %45 = arith.subf %44, %33 : vector<16x32xf32>
      %46 = vector.broadcast %35 : vector<1x32xf32> to vector<16x32xf32>
      %47 = arith.mulf %46, %45 : vector<16x32xf32>
      %48 = arith.addf %33, %47 : vector<16x32xf32>
      %49 = arith.mulf %48, %48 : vector<16x32xf32>
      %cst_26 = arith.constant dense<0.000000e+00> : vector<16xf32>
      %50 = vector.multi_reduction <add>, %49, %cst_26 [1] : vector<16x32xf32> to vector<16xf32>
      %51 = vector.shape_cast %50 : vector<16xf32> to vector<16x1xf32>
      %cst_27 = arith.constant 1.000000e-24 : f32
      %52 = vector.broadcast %cst_27 : f32 to vector<16x1xf32>
      %53 = arith.maximumf %51, %52 : vector<16x1xf32>
      %54 = math.rsqrt %53 : vector<16x1xf32>
      %55 = vector.broadcast %54 : vector<16x1xf32> to vector<16x32xf32>
      %56 = arith.mulf %48, %55 : vector<16x32xf32>
      %57 = arith.truncf %56 : vector<16x32xf32> to vector<16x32xbf16>
      %c0_28 = arith.constant 0 : index
      %c0_29 = arith.constant 0 : index
      %58 = vector.load %arg8[%c0_28, %c0_29] : memref<16x32xbf16, #tpu.memory_space<vmem>>, vector<16x32xbf16>
      tpu.vector_store %arg8[%c0_28, %c0_29], %57 {strides = array<i32>} : memref<16x32xbf16, #tpu.memory_space<vmem>>, vector<16x32xbf16>,
    } else {
    }
    return
  }
  func.func @transform_0(%arg0: i32, %arg1: i32) -> (i32, i32) {
    %c0_i32 = arith.constant 0 : i32
    %c0_i32_0 = arith.constant 0 : i32
    return %arg0, %c0_i32 : i32, i32
  }
  func.func @transform_1(%arg0: i32, %arg1: i32) -> (i32, i32) {
    %c0_i32 = arith.constant 0 : i32
    %c0_i32_0 = arith.constant 0 : i32
    return %c0_i32, %arg1 : i32, i32
  }
  func.func @transform_2(%arg0: i32, %arg1: i32) -> (i32, i32) {
    %c0_i32 = arith.constant 0 : i32
    %c0_i32_0 = arith.constant 0 : i32
    return %c0_i32, %arg1 : i32, i32
  }
  func.func @transform_3(%arg0: i32, %arg1: i32) -> (i32, i32) {
    %c0_i32 = arith.constant 0 : i32
    %c0_i32_0 = arith.constant 0 : i32
    return %c0_i32, %arg1 : i32, i32
  }
  func.func @transform_4(%arg0: i32, %arg1: i32) -> (i32, i32) {
    %c0_i32 = arith.constant 0 : i32
    %c0_i32_0 = arith.constant 0 : i32
    return %arg1, %c0_i32 : i32, i32
  }
  func.func @transform_5(%arg0: i32, %arg1: i32) -> (i32, i32) {
    %c0_i32 = arith.constant 0 : i32
    %c0_i32_0 = arith.constant 0 : i32
    %c0_i32_1 = arith.constant 0 : i32
    return %c0_i32, %c0_i32_0 : i32, i32
  }
  func.func @transform_6(%arg0: i32, %arg1: i32) -> (i32, i32) {
    %c0_i32 = arith.constant 0 : i32
    %c0_i32_0 = arith.constant 0 : i32
    return %arg0, %c0_i32 : i32, i32
  }
}

module attributes {stable_mosaic.version = 11 : i64} {
  func.func @_head_kernel(%arg0: i32, %arg1: memref<2x32xbf16, #tpu.memory_space<vmem>>, %arg2: memref<32x128xbf16, #tpu.memory_space<vmem>>, %arg3: memref<1x128xf32, #tpu.memory_space<vmem>>, %arg4: memref<2x128xf32, #tpu.memory_space<vmem>>) attributes {dimension_semantics = [#tpu.dimension_semantics<parallel>], iteration_bounds = array<i64: 1>, scalar_prefetch = 0 : i64, scratch_operands = 0 : i64, tpu.core_type = #tpu.core_type<tc>, window_params = [{pipeline_mode = #tpu.pipeline_mode<synchronous>, transform_indices = @transform_0, window_bounds = array<i64: 2, 32>}, {transform_indices = @transform_1, window_bounds = array<i64: 32, 128>}, {transform_indices = @transform_2, window_bounds = array<i64: 1, 128>}, {transform_indices = @transform_3, window_bounds = array<i64: 2, 128>}]} {
    %c0 = arith.constant 0 : index
    %c0_0 = arith.constant 0 : index
    %0 = vector.load %arg1[%c0, %c0_0] : memref<2x32xbf16, #tpu.memory_space<vmem>>, vector<2x32xbf16>
    %c0_1 = arith.constant 0 : index
    %c0_2 = arith.constant 0 : index
    %1 = vector.load %arg2[%c0_1, %c0_2] : memref<32x128xbf16, #tpu.memory_space<vmem>>, vector<32x128xbf16>
    %cst = arith.constant dense<0.000000e+00> : vector<2x128xf32>
    %2 = tpu.matmul %0, %1, %cst {dimension_numbers = #tpu.dot_dimension_numbers<[1], [0], [0], [1], [0, 0, 1, 1], [], []>} : vector<2x32xbf16>, vector<32x128xbf16>, vector<2x128xf32> -> vector<2x128xf32>
    %c0_3 = arith.constant 0 : index
    %c0_4 = arith.constant 0 : index
    %3 = vector.load %arg3[%c0_3, %c0_4] : memref<1x128xf32, #tpu.memory_space<vmem>>, vector<1x128xf32>
    %4 = vector.broadcast %3 : vector<1x128xf32> to vector<2x128xf32>
    %5 = arith.mulf %4, %2 : vector<2x128xf32>
    %c0_5 = arith.constant 0 : index
    %c0_6 = arith.constant 0 : index
    %6 = vector.load %arg4[%c0_5, %c0_6] : memref<2x128xf32, #tpu.memory_space<vmem>>, vector<2x128xf32>
    tpu.vector_store %arg4[%c0_5, %c0_6], %5 {strides = array<i32>} : memref<2x128xf32, #tpu.memory_space<vmem>>, vector<2x128xf32>,
    return
  }
  func.func @transform_0(%arg0: i32) -> (i32, i32) {
    %c0_i32 = arith.constant 0 : i32
    %c0_i32_0 = arith.constant 0 : i32
    %c0_i32_1 = arith.constant 0 : i32
    return %c0_i32, %c0_i32_0 : i32, i32
  }
  func.func @transform_1(%arg0: i32) -> (i32, i32) {
    %c0_i32 = arith.constant 0 : i32
    %c0_i32_0 = arith.constant 0 : i32
    return %c0_i32, %arg0 : i32, i32
  }
  func.func @transform_2(%arg0: i32) -> (i32, i32) {
    %c0_i32 = arith.constant 0 : i32
    %c0_i32_0 = arith.constant 0 : i32
    return %c0_i32, %arg0 : i32, i32
  }
  func.func @transform_3(%arg0: i32) -> (i32, i32) {
    %c0_i32 = arith.constant 0 : i32
    %c0_i32_0 = arith.constant 0 : i32
    return %c0_i32, %arg0 : i32, i32
  }
}

</mosaic_0001>

<llo_original>
// kernel: mul.30
$region0: #{mul.30}
  #allocation0 [shape = 's32[1]{0}', space=sflag, size = 0x4, scoped, tag = 'scoped memory for mul.30']
  %s0 = inlined_call_operand.vmem [shape: f32[32,32], index: 0, kind: input, shape index: {}]
  %s1 = inlined_call_operand.vmem [shape: f32[32,32], index: 1, kind: input, shape index: {}]
  %s2 = inlined_call_operand.vmem [shape: f32[32,32], index: 2, kind: output, shape index: {}]
  %v3 = vld [vmem:[%s0] sm:$0xff]
  %v4 = vld [vmem:[%s1] sm:$0xff]
  %5 = xla_tuple %v3, %v4
  %6 = xla_tuple %5
  %v7 = vmul.f32 %v3, %v4
  %8 = xla_tuple %v7
  %9 = vst [vmem:[%s2] sm:$0xff] %v7
  %s10 = scalar_lea.vmem %s0, 8
  %v11 = vld [vmem:[%s10] sm:$0xff]
  %s12 = scalar_lea.vmem %s1, 8
  %v13 = vld [vmem:[%s12] sm:$0xff]
  %14 = xla_tuple %v11, %v13
  %15 = xla_tuple %14
  %v16 = vmul.f32 %v11, %v13
  %17 = xla_tuple %v16
  %s18 = scalar_lea.vmem %s2, 8
  %19 = vst [vmem:[%s18] sm:$0xff] %v16
  %s20 = scalar_lea.vmem %s0, 16
  %v21 = vld [vmem:[%s20] sm:$0xff]
  %s22 = scalar_lea.vmem %s1, 16
  %v23 = vld [vmem:[%s22] sm:$0xff]
  %24 = xla_tuple %v21, %v23
  %25 = xla_tuple %24
  %v26 = vmul.f32 %v21, %v23
  %27 = xla_tuple %v26
  %s28 = scalar_lea.vmem %s2, 16
  %29 = vst [vmem:[%s28] sm:$0xff] %v26
  %s30 = scalar_lea.vmem %s0, 24
  %v31 = vld [vmem:[%s30] sm:$0xff]
  %s32 = scalar_lea.vmem %s1, 24
  %v33 = vld [vmem:[%s32] sm:$0xff]
  %34 = xla_tuple %v31, %v33
  %35 = xla_tuple %34
  %v36 = vmul.f32 %v31, %v33
  %37 = xla_tuple %v36
  %s38 = scalar_lea.vmem %s2, 24
  %39 = vst [vmem:[%s38] sm:$0xff] %v36

// kernel: tile.19
$region0: #{tile.19}
  %s0 = inlined_call_operand.vmem [shape: f32[8,4,8], index: 0, kind: input, shape index: {}]
  %s1 = inlined_call_operand.vmem [shape: f32[8,32], index: 1, kind: output, shape index: {}]
  $region1: #{tile.19} parent=0
    #allocation0 [shape = 'u8[32768]{0}', space=vmem, size = 0x8000, scoped, tag = 'scoped mem for input reshape']
    %s3 = ssub.s32 16, 1
    %s4 = scalar_lea.vmem %s0, 28
    %v5 = vld [vmem:[%s4] sm:%s3]
    %s6 = scalar_lea.vmem [#allocation0], 56
    %7 = vst [vmem:[%s6] sm:%s3] %v5
    %s8 = scalar_lea.vmem %s0, 24
    %v9 = vld [vmem:[%s8] sm:%s3]
    %s10 = scalar_lea.vmem [#allocation0], 48
    %11 = vst [vmem:[%s10] sm:%s3] %v9
    %s12 = scalar_lea.vmem %s0, 20
    %v13 = vld [vmem:[%s12] sm:%s3]
    %s14 = scalar_lea.vmem [#allocation0], 40
    %15 = vst [vmem:[%s14] sm:%s3] %v13
    %s16 = scalar_lea.vmem %s0, 16
    %v17 = vld [vmem:[%s16] sm:%s3]
    %s18 = scalar_lea.vmem [#allocation0], 32
    %19 = vst [vmem:[%s18] sm:%s3] %v17
    %s20 = scalar_lea.vmem %s0, 12
    %v21 = vld [vmem:[%s20] sm:%s3]
    %s22 = scalar_lea.vmem [#allocation0], 24
    %23 = vst [vmem:[%s22] sm:%s3] %v21
    %s24 = scalar_lea.vmem %s0, 8
    %v25 = vld [vmem:[%s24] sm:%s3]
    %s26 = scalar_lea.vmem [#allocation0], 16
    %27 = vst [vmem:[%s26] sm:%s3] %v25
    %s28 = scalar_lea.vmem %s0, 4
    %v29 = vld [vmem:[%s28] sm:%s3]
    %s30 = scalar_lea.vmem [#allocation0], 8
    %31 = vst [vmem:[%s30] sm:%s3] %v29
    %v32 = vld [vmem:[%s0] sm:%s3]
    %33 = vst [vmem:[#allocation0] sm:%s3] %v32
    %v34 = vld [vmem:[#allocation0] ss:$8 sm:$0xf]
    %v35 = vld [vmem:[#allocation0] ss:$8 sm:$0xf0]
    %vm36 = vcmask 1047556
    %v37 = vsel %vm36, %v35, %v34
    %vm38 = vcmask 64512
    %39 = vst.msk [vmem:[%s1] sm:$0xff] %vm38, %v37
    %s40 = scalar_lea.vmem [#allocation0], 3
    %v41 = vld [vmem:[%s40] ss:$8 sm:$0xf]
    %s42 = scalar_lea.vmem [#allocation0], 3
    %v43 = vld [vmem:[%s42] ss:$8 sm:$0xf0]
    %vm44 = vcmask 1047556
    %v45 = vsel %vm44, %v43, %v41
    %46 = vrot.lane.b32.xlu0 %v45, 24
    %v47 = vpop.permute.xlu0 %46
    %vm48 = vcmask 261312
    %49 = vst.msk [vmem:[%s1] sm:$0xff] %vm48, %v47
    %s50 = scalar_lea.vmem [#allocation0], 2
    %v51 = vld [vmem:[%s50] ss:$8 sm:$0xf]
    %s52 = scalar_lea.vmem [#allocation0], 2
    %v53 = vld [vmem:[%s52] ss:$8 sm:$0xf0]
    %vm54 = vcmask 1047556
    %v55 = vsel %vm54, %v53, %v51
    %56 = vrot.lane.b32.xlu0 %v55, 16
    %v57 = vpop.permute.xlu0 %56
    %vm58 = vcmask 195712
    %59 = vst.msk [vmem:[%s1] sm:$0xff] %vm58, %v57
    %s60 = scalar_lea.vmem [#allocation0], 1
    %v61 = vld [vmem:[%s60] ss:$8 sm:$0xf]
    %s62 = scalar_lea.vmem [#allocation0], 1
    %v63 = vld [vmem:[%s62] ss:$8 sm:$0xf0]
    %vm64 = vcmask 1047556
    %v65 = vsel %vm64, %v63, %v61
    %66 = vrot.lane.b32.xlu0 %v65, 8
    %v67 = vpop.permute.xlu0 %66
    %vm68 = vcmask 130112
    %69 = vst.msk [vmem:[%s1] sm:$0xff] %vm68, %v67

// kernel: _lambda_.9
$region0: #{_lambda_.9}
  #allocation0 [shape = 'u32[]', space=smem, size = 0x4, offset = 0x4, fixed_abs, tag = 'smem constant byte address 0x4 - core index']
  #allocation1 [shape = 'u32[72,128]{1,0:T(1,128)}', space=vmem, size = 0x9000, scoped, tag = 'internal scratch']
  %s0 = inlined_call_operand.vmem [shape: bf16[2,32], index: 0, kind: input, shape index: {}]
  %s1 = inlined_call_operand.vmem [shape: bf16[32,128], index: 1, kind: input, shape index: {}]
  %s2 = inlined_call_operand.vmem [shape: f32[1,128], index: 2, kind: input, shape index: {}]
  %s3 = inlined_call_operand.hbm [shape: f32[2,128], index: 3, kind: output, shape index: {}]
  %s4 = sld [smem:[#allocation0]]
  $region22: #{_lambda_.9} parent=0
    _
  %s6 = ssub.s32 1, %s4
  %s7 = scalar_select 0, %s6, %s4
  $region1: #{_lambda_.9} parent=0
    #allocation2 [shape = 'u8[1024]{0}', space=vmem, size = 0x400, scoped, tag = 'output window, operand 0, single buffered']
    #allocation3 [shape = 's32[1]{0}', space=sflag, size = 0x4, scoped, tag = 'scoped memory for _lambda_.9']
    %8 = vsyncpa [#allocation3], 0
    // Predicated region
    $region2: #{_lambda_.9} parent=1 // pred_check
      _
    $region3: #{_lambda_.9} parent=1 // pred_check_branch
      %10 = sbr.rel (0) target = $region5
    $region4: #{_lambda_.9} parent=1 // pred_region
      _
    $region5: #{_lambda_.9} parent=1 // pred_fallthru
      _
    // Predicated region
    $region6: #{_lambda_.9} parent=1 // pred_check
      _
    $region7: #{_lambda_.9} parent=1 // pred_check_branch
      %12 = sbr.rel (0) target = $region9
    $region8: #{_lambda_.9} parent=1 // pred_region
      _
    $region9: #{_lambda_.9} parent=1 // pred_fallthru
      _
    // Predicated region
    $region10: #{_lambda_.9} parent=1 // pred_check
      _
    $region11: #{_lambda_.9} parent=1 // pred_check_branch
      %14 = sbr.rel (0) target = $region13
    $region12: #{_lambda_.9} parent=1 // pred_region
      _
    $region13: #{_lambda_.9} parent=1 // pred_fallthru
      _
    %v16 = vld [vmem:[%s0] sm:$0x1]
    %v17 = vld [vmem:[%s1] sm:$0xf]
    %v18 = vld [vmem:[%s1 + $0x4] sm:$0xf]
    %v19 = vld [vmem:[%s1 + $0x8] sm:$0xf]
    %v20 = vld [vmem:[%s1 + $0xc] sm:$0xf]
    %v25 = vunpack.c.l.b16 %v17
    %v26 = vunpack.c.l.b16 %v18
    %v27 = vunpack.c.l.b16 %v19
    %v28 = vunpack.c.l.b16 %v20
    %v29 = vpack.c.b16 %v26, %v25
    %v30 = vpack.c.b16 %v28, %v27
    %vm33 = vcmask 261120
    %v35 = vsel %vm33, %v16, 0
    %37 = vmatpush.bf16.msra.mxu0 0
    %38 = vmatpush.bf16.msra.mxu0 0
    %39 = vmatpush.bf16.msra.mxu0 0
    %40 = vmatpush.bf16.msra.mxu0 0
    %41 = vmatpush.bf16.msra.mxu0 0
    %42 = vmatpush.bf16.msra.mxu0 0
    %43 = vmatpush.bf16.msra.mxu0 %v30
    %44 = vmatpush.bf16.msra.mxu0 %v29
    %45 = vmatmul.bf16.gmra.mxu0 %v35
    %v46 = vpop.f32.mrf.mxu0
    %v47 = vadd.f32 0.0, %v46
    %v48 = vpop.f32.mrf.mxu0
    %49 = vdwg.mxu0
    %v50 = vld [vmem:[%s2] sm:$0x1]
    %v52 = vperm.slane %v50, 0
    %v54 = vmul.f32 %v52, %v47
    %55 = vst [vmem:[#allocation2] sm:$0x3] %v54
    // Predicated region
    $region14: #{_lambda_.9} parent=1 // pred_check
      _
    $region15: #{_lambda_.9} parent=1 // pred_check_branch
      %57 = sbr.rel (0) target = $region17
    $region16: #{_lambda_.9} parent=1 // pred_region
      %59 = vsyncadd [#allocation3], 0
      %s61 = sshll.u32 [#allocation2], 4
      %s62 = int_to_ptr.vmem [resolvable:$true] %s61
      %s63 = sshll.u32 %s3, 4
      %s64 = int_to_ptr.hbm [resolvable:$true] %s63
      %66 = dma.vmem_to_hbm [thread:$0]  %s62, 32, %s64, [#allocation3]
    $region17: #{_lambda_.9} parent=1 // pred_fallthru
      _
    // Predicated region
    $region18: #{_lambda_.9} parent=1 // pred_check
      _
    $region19: #{_lambda_.9} parent=1 // pred_check_branch
      %68 = sbr.rel (0) target = $region21
    $region20: #{_lambda_.9} parent=1 // pred_region
      %70 = dma.done [#allocation3], 32
    $region21: #{_lambda_.9} parent=1 // pred_fallthru
      _
    %71 = vsyncpa [#allocation3], 1

// kernel: _lambda_.6
$region0: #{_lambda_.6}
  #allocation0 [shape = 'u32[]', space=smem, size = 0x4, offset = 0x4, fixed_abs, tag = 'smem constant byte address 0x4 - core index']
  #allocation1 [shape = 'u32[72,128]{1,0:T(1,128)}', space=vmem, size = 0x9000, scoped, tag = 'internal scratch']
  #allocation2 [shape = 'f32[16,32]{1,0:T(8,128)}', space=vmem, size = 0x2000, scoped, tag = 'scratch operand']
  %s0 = inlined_call_operand.vmem [shape: bf16[16,32], index: 0, kind: input, shape index: {}]
  %s1 = inlined_call_operand.vmem [shape: bf16[32,128], index: 1, kind: input, shape index: {}]
  %s2 = inlined_call_operand.vmem [shape: bf16[32,128], index: 2, kind: input, shape index: {}]
  %s3 = inlined_call_operand.vmem [shape: f32[2,128], index: 3, kind: input, shape index: {}]
  %s4 = inlined_call_operand.vmem [shape: bf16[128,32], index: 4, kind: input, shape index: {}]
  %s5 = inlined_call_operand.vmem [shape: f32[1,32], index: 5, kind: input, shape index: {}]
  %s6 = inlined_call_operand.vmem [shape: bf16[16,32], index: 6, kind: output, shape index: {}]
  %s7 = sld [smem:[#allocation0]]
  $region42: #{_lambda_.6} parent=0
    _
  %s9 = ssub.s32 1, %s7
  %s10 = scalar_select 0, %s9, %s7
  // Predicated region
  $region2: #{_lambda_.6} parent=0 // pred_check
    _
  $region3: #{_lambda_.6} parent=0 // pred_check_branch
    %12 = sbr.rel (0) target = $region5
  $region4: #{_lambda_.6} parent=0 // pred_region
    _
  $region5: #{_lambda_.6} parent=0 // pred_fallthru
    _
  // Predicated region
  $region6: #{_lambda_.6} parent=0 // pred_check
    _
  $region7: #{_lambda_.6} parent=0 // pred_check_branch
    %14 = sbr.rel (0) target = $region9
  $region8: #{_lambda_.6} parent=0 // pred_region
    _
  $region9: #{_lambda_.6} parent=0 // pred_fallthru
    _
  // Predicated region
  $region10: #{_lambda_.6} parent=0 // pred_check
    _
  $region11: #{_lambda_.6} parent=0 // pred_check_branch
    %16 = sbr.rel (0) target = $region13
  $region12: #{_lambda_.6} parent=0 // pred_region
    _
  $region13: #{_lambda_.6} parent=0 // pred_fallthru
    _
  // Predicated region
  $region14: #{_lambda_.6} parent=0 // pred_check
    _
  $region15: #{_lambda_.6} parent=0 // pred_check_branch
    %18 = sbr.rel (0) target = $region17
  $region16: #{_lambda_.6} parent=0 // pred_region
    _
  $region17: #{_lambda_.6} parent=0 // pred_fallthru
    _
  // Predicated region
  $region18: #{_lambda_.6} parent=0 // pred_check
    _
  $region19: #{_lambda_.6} parent=0 // pred_check_branch
    %20 = sbr.rel (0) target = $region21
  $region20: #{_lambda_.6} parent=0 // pred_region
    _
  $region21: #{_lambda_.6} parent=0 // pred_fallthru
    _
  // Predicated region
  $region22: #{_lambda_.6} parent=0 // pred_check
    _
  $region23: #{_lambda_.6} parent=0 // pred_check_branch
    %22 = sbr.rel (0) target = $region25
  $region24: #{_lambda_.6} parent=0 // pred_region
    _
  $region25: #{_lambda_.6} parent=0 // pred_fallthru
    _
  %p24 = scmp.eq.s32.totalorder 0, 0
  // Predicated region
  $region26: #{_lambda_.6} parent=0 // pred_check
    %p25 = pneg %p24
  $region27: #{_lambda_.6} parent=0 // pred_check_branch
    %27 = sbr.rel (%p25) target = $region29
  $region28: #{_lambda_.6} parent=0 // pred_region
    %vm28 = vcmask 261120
    %29 = vst.msk [vmem:[#allocation2] sm:$0xff] %vm28, 0.0
    %30 = vst.msk [vmem:[#allocation2 + $0x8] sm:$0xff] %vm28, 0.0
  $region29: #{_lambda_.6} parent=0 // pred_fallthru
    _
  %v31 = vld [vmem:[%s0] sm:$0xf]
  %v32 = vld [vmem:[%s0 + $0x4] sm:$0xf]
  %v33 = vld [vmem:[%s3] sm:$0x3]
  %v34 = vld [vmem:[%s1] sm:$0xf]
  %v35 = vld [vmem:[%s1 + $0x4] sm:$0xf]
  %v36 = vld [vmem:[%s1 + $0x8] sm:$0xf]
  %v37 = vld [vmem:[%s1 + $0xc] sm:$0xf]
  %v40 = vunpack.c.l.b16 %v31
  %v41 = vunpack.c.l.b16 %v32
  %v42 = vpack.c.b16 %v41, %v40
  %v47 = vunpack.c.l.b16 %v34
  %v48 = vunpack.c.l.b16 %v35
  %v49 = vunpack.c.l.b16 %v36
  %v50 = vunpack.c.l.b16 %v37
  %v51 = vpack.c.b16 %v48, %v47
  %v52 = vpack.c.b16 %v50, %v49
  %vm55 = vcmask 261120
  %v57 = vsel %vm55, %v42, 0
  %59 = vmatpush.bf16.msra.mxu0 0
  %60 = vmatpush.bf16.msra.mxu0 0
  %61 = vmatpush.bf16.msra.mxu0 0
  %62 = vmatpush.bf16.msra.mxu0 0
  %63 = vmatpush.bf16.msra.mxu0 0
  %64 = vmatpush.bf16.msra.mxu0 0
  %65 = vmatpush.bf16.msra.mxu0 %v52
  %66 = vmatpush.bf16.msra.mxu0 %v51
  %67 = vmatmul.bf16.gmra.mxu0 %v57
  %v68 = vpop.f32.mrf.mxu0
  %v69 = vadd.f32 0.0, %v68
  %v70 = vpop.f32.mrf.mxu0
  %v71 = vadd.f32 0.0, %v70
  %72 = vdwg.mxu0
  %v73 = vperm.slane %v33, 0
  %v74 = vmul.f32 %v73, %v69
  %v75 = vmul.f32 %v73, %v71
  %v76 = vmul.f32 %v33, 5.656854
  %v77 = vld [vmem:[%s2] sm:$0xf]
  %v78 = vld [vmem:[%s2 + $0x4] sm:$0xf]
  %v79 = vld [vmem:[%s2 + $0x8] sm:$0xf]
  %v80 = vld [vmem:[%s2 + $0xc] sm:$0xf]
  %v85 = vunpack.c.l.b16 %v77
  %v86 = vunpack.c.l.b16 %v78
  %v87 = vunpack.c.l.b16 %v79
  %v88 = vunpack.c.l.b16 %v80
  %v89 = vpack.c.b16 %v86, %v85
  %v90 = vpack.c.b16 %v88, %v87
  %93 = vmatpush.bf16.msra.mxu0 0
  %94 = vmatpush.bf16.msra.mxu0 0
  %95 = vmatpush.bf16.msra.mxu0 0
  %96 = vmatpush.bf16.msra.mxu0 0
  %97 = vmatpush.bf16.msra.mxu0 0
  %98 = vmatpush.bf16.msra.mxu0 0
  %99 = vmatpush.bf16.msra.mxu0 %v90
  %100 = vmatpush.bf16.msra.mxu0 %v89
  %101 = vmatmul.bf16.gmra.mxu0 %v57
  %v102 = vpop.f32.mrf.mxu0
  %v103 = vadd.f32 0.0, %v102
  %v104 = vpop.f32.mrf.mxu0
  %v105 = vadd.f32 0.0, %v104
  %106 = vdwg.mxu0
  %v107 = vperm.slane %v76, 1
  %v108 = vmul.f32 %v107, %v103
  %v109 = vmul.f32 %v107, %v105
  %v110 = vxor.u32 %v108, 2147483648
  %v111 = vxor.u32 %v109, 2147483648
  %v112 = vmul.f32 %v110, 1.442695
  %v113 = vpow.pop %v112
  %v114 = vmul.f32 %v111, 1.442695
  %v115 = vpow.pop %v114
  %v116 = vadd.f32 %v113, 1.0
  %v117 = vadd.f32 %v115, 1.0
  %v118 = vrcp.pop %v116
  %v119 = vmul.f32 %v116, %v118
  %v120 = vsub.f32 1.0, %v119
  %v121 = vmul.f32 %v118, %v120
  %v122 = vadd.f32 %v118, %v121
  %vm123 = vweird.f32 %v116
  %vm124 = vweird.f32 %v118
  %vm125 = vmor %vm123, %vm124
  %v126 = vsel %vm125, %v118, %v122
  %v127 = vand.u32 2147483647, %v116
  %vm128 = vcmp.eq.f32.partialorder %v127, 8.507059e+37
  %v129 = vand.u32 %v116, 2147483648
  %v130 = vor.u32 1.1754944e-38, %v129
  %v131 = vsel %vm128, %v130, %v126
  %v132 = vmul.f32 1.0, %v131
  %v133 = vrcp.pop %v117
  %v134 = vmul.f32 %v117, %v133
  %v135 = vsub.f32 1.0, %v134
  %v136 = vmul.f32 %v133, %v135
  %v137 = vadd.f32 %v133, %v136
  %vm138 = vweird.f32 %v117
  %vm139 = vweird.f32 %v133
  %vm140 = vmor %vm138, %vm139
  %v141 = vsel %vm140, %v133, %v137
  %v142 = vand.u32 2147483647, %v117
  %vm143 = vcmp.eq.f32.partialorder %v142, 8.507059e+37
  %v144 = vand.u32 %v117, 2147483648
  %v145 = vor.u32 1.1754944e-38, %v144
  %v146 = vsel %vm143, %v145, %v141
  %v147 = vmul.f32 1.0, %v146
  %v148 = vmul.f32 %v108, %v132
  %v149 = vmul.f32 %v109, %v147
  %v150 = vld [vmem:[#allocation2] sm:$0xff]
  %v151 = vld [vmem:[#allocation2 + $0x8] sm:$0xff]
  %v152 = vmul.f32 %v74, %v148
  %v153 = vmul.f32 %v75, %v149
  %v154 = vpack.c.bf16 %v153, %v152
  %v155 = vld [vmem:[%s4] sm:$0xf]
  %v156 = vld [vmem:[%s4 + $0x4] sm:$0xf]
  %v157 = vld [vmem:[%s4 + $0x8] sm:$0xf]
  %v158 = vld [vmem:[%s4 + $0xc] sm:$0xf]
  %v159 = vld [vmem:[%s4 + $0x10] sm:$0xf]
  %v160 = vld [vmem:[%s4 + $0x14] sm:$0xf]
  %v161 = vld [vmem:[%s4 + $0x18] sm:$0xf]
  %v162 = vld [vmem:[%s4 + $0x1c] sm:$0xf]
  %v163 = vld [vmem:[%s4 + $0x20] sm:$0xf]
  %v164 = vld [vmem:[%s4 + $0x24] sm:$0xf]
  %v165 = vld [vmem:[%s4 + $0x28] sm:$0xf]
  %v166 = vld [vmem:[%s4 + $0x2c] sm:$0xf]
  %v167 = vld [vmem:[%s4 + $0x30] sm:$0xf]
  %v168 = vld [vmem:[%s4 + $0x34] sm:$0xf]
  %v169 = vld [vmem:[%s4 + $0x38] sm:$0xf]
  %v170 = vld [vmem:[%s4 + $0x3c] sm:$0xf]
  %v187 = vunpack.c.l.b16 %v155
  %v188 = vunpack.c.l.b16 %v156
  %v189 = vunpack.c.l.b16 %v157
  %v190 = vunpack.c.l.b16 %v158
  %v191 = vunpack.c.l.b16 %v159
  %v192 = vunpack.c.l.b16 %v160
  %v193 = vunpack.c.l.b16 %v161
  %v194 = vunpack.c.l.b16 %v162
  %v195 = vunpack.c.l.b16 %v163
  %v196 = vunpack.c.l.b16 %v164
  %v197 = vunpack.c.l.b16 %v165
  %v198 = vunpack.c.l.b16 %v166
  %v199 = vunpack.c.l.b16 %v167
  %v200 = vunpack.c.l.b16 %v168
  %v201 = vunpack.c.l.b16 %v169
  %v202 = vunpack.c.l.b16 %v170
  %v203 = vpack.c.b16 %v188, %v187
  %v204 = vpack.c.b16 %v190, %v189
  %v205 = vpack.c.b16 %v192, %v191
  %v206 = vpack.c.b16 %v194, %v193
  %v207 = vpack.c.b16 %v196, %v195
  %v208 = vpack.c.b16 %v198, %v197
  %v209 = vpack.c.b16 %v200, %v199
  %v210 = vpack.c.b16 %v202, %v201
  %219 = vmatpush.bf16.msra.mxu0 %v210
  %220 = vmatpush.bf16.msra.mxu0 %v209
  %221 = vmatpush.bf16.msra.mxu0 %v208
  %222 = vmatpush.bf16.msra.mxu0 %v207
  %223 = vmatpush.bf16.msra.mxu0 %v206
  %224 = vmatpush.bf16.msra.mxu0 %v205
  %225 = vmatpush.bf16.msra.mxu0 %v204
  %226 = vmatpush.bf16.msra.mxu0 %v203
  %227 = vmatmul.bf16.gmra.mxu0 %v154
  %v228 = vpop.f32.mrf.mxu0
  %v229 = vadd.f32 0.0, %v228
  %v230 = vpop.f32.mrf.mxu0
  %v231 = vadd.f32 0.0, %v230
  %232 = vdwg.mxu0
  %v233 = vadd.f32 %v150, %v229
  %v234 = vadd.f32 %v151, %v231
  %235 = vst.msk [vmem:[#allocation2] sm:$0xff] %vm55, %v233
  %236 = vst.msk [vmem:[#allocation2 + $0x8] sm:$0xff] %vm55, %v234
  // Predicated region
  $region30: #{_lambda_.6} parent=0 // pred_check
    %p237 = pneg %p24
  $region31: #{_lambda_.6} parent=0 // pred_check_branch
    %239 = sbr.rel (%p237) target = $region33
  $region32: #{_lambda_.6} parent=0 // pred_region
    %v240 = vunpack.c.l.bf16 %v31
    %v241 = vunpack.c.l.bf16 %v32
    %v242 = vld [vmem:[%s5] sm:$0x1]
    %v243 = vand.u32 2147483647, %v242
    %v244 = vld [vmem:[#allocation2] sm:$0xff]
    %v245 = vld [vmem:[#allocation2 + $0x8] sm:$0xff]
    %v246 = vmul.f32 %v244, %v244
    %v247 = vmul.f32 %v245, %v245
    %v248 = vsel %vm55, %v246, 0.0
    %249 = vadd.xlane.f32.xlu0 %v248
    %v250 = vpop.xlane.xlu0 %249
    %v251 = vsel %vm55, %v247, 0.0
    %252 = vadd.xlane.f32.xlu0 %v251
    %v253 = vpop.xlane.xlu0 %252
    %v254 = vmax.f32 %v250, 1e-24
    %v255 = vmax.f32 %v253, 1e-24
    %v256 = vrsqrt.pop %v254
    %v257 = vmul.f32 %v256, %v254
    %v258 = vmul.f32 %v257, %v256
    %v259 = vmul.f32 0.5, %v258
    %v260 = vsub.f32 1.5, %v259
    %v261 = vmul.f32 %v256, %v260
    %vm262 = vweird.f32 %v254
    %vm263 = vweird.f32 %v256
    %vm264 = vmor %vm262, %vm263
    %v265 = vsel %vm264, %v256, %v261
    %v266 = vrsqrt.pop %v255
    %v267 = vmul.f32 %v266, %v255
    %v268 = vmul.f32 %v267, %v266
    %v269 = vmul.f32 0.5, %v268
    %v270 = vsub.f32 1.5, %v269
    %v271 = vmul.f32 %v266, %v270
    %vm272 = vweird.f32 %v255
    %vm273 = vweird.f32 %v266
    %vm274 = vmor %vm272, %vm273
    %v275 = vsel %vm274, %v266, %v271
    %v276 = vmul.f32 %v244, %v265
    %v277 = vmul.f32 %v245, %v275
    %v278 = vsub.f32 %v276, %v240
    %v279 = vsub.f32 %v277, %v241
    %v281 = vperm.slane %v243, 0
    %v283 = vmul.f32 %v281, %v278
    %v284 = vmul.f32 %v281, %v279
    %v285 = vadd.f32 %v240, %v283
    %v286 = vadd.f32 %v241, %v284
    %v287 = vmul.f32 %v285, %v285
    %v288 = vmul.f32 %v286, %v286
    %v289 = vsel %vm55, %v287, 0.0
    %290 = vadd.xlane.f32.xlu0 %v289
    %v291 = vpop.xlane.xlu0 %290
    %v292 = vsel %vm55, %v288, 0.0
    %293 = vadd.xlane.f32.xlu0 %v292
    %v294 = vpop.xlane.xlu0 %293
    %v295 = vmax.f32 %v291, 1e-24
    %v296 = vmax.f32 %v294, 1e-24
    %v297 = vrsqrt.pop %v295
    %v298 = vmul.f32 %v297, %v295
    %v299 = vmul.f32 %v298, %v297
    %v300 = vmul.f32 0.5, %v299
    %v301 = vsub.f32 1.5, %v300
    %v302 = vmul.f32 %v297, %v301
    %vm303 = vweird.f32 %v295
    %vm304 = vweird.f32 %v297
    %vm305 = vmor %vm303, %vm304
    %v306 = vsel %vm305, %v297, %v302
    %v307 = vrsqrt.pop %v296
    %v308 = vmul.f32 %v307, %v296
    %v309 = vmul.f32 %v308, %v307
    %v310 = vmul.f32 0.5, %v309
    %v311 = vsub.f32 1.5, %v310
    %v312 = vmul.f32 %v307, %v311
    %vm313 = vweird.f32 %v296
    %vm314 = vweird.f32 %v307
    %vm315 = vmor %vm313, %vm314
    %v316 = vsel %vm315, %v307, %v312
    %v317 = vmul.f32 %v285, %v306
    %v318 = vmul.f32 %v286, %v316
    %v319 = vpack.c.bf16 %v317, %v317
    %v320 = vpack.c.bf16 %v318, %v318
    %vm321 = vcmask 257024
    %322 = vst.msk [vmem:[%s6] sm:$0xf] %vm321, %v319
    %323 = vst.msk [vmem:[%s6 + $0x4] sm:$0xf] %vm321, %v320
  $region33: #{_lambda_.6} parent=0 // pred_fallthru
    _
  // Predicated region
  $region34: #{_lambda_.6} parent=0 // pred_check
    _
  $region35: #{_lambda_.6} parent=0 // pred_check_branch
    %325 = sbr.rel (0) target = $region37
  $region36: #{_lambda_.6} parent=0 // pred_region
    _
  $region37: #{_lambda_.6} parent=0 // pred_fallthru
    _
  // Predicated region
  $region38: #{_lambda_.6} parent=0 // pred_check
    _
  $region39: #{_lambda_.6} parent=0 // pred_check_branch
    %327 = sbr.rel (0) target = $region41
  $region40: #{_lambda_.6} parent=0 // pred_region
    _
  $region41: #{_lambda_.6} parent=0 // pred_fallthru
    _

// kernel: _lambda_.5
$region0: #{_lambda_.5}
  #allocation0 [shape = 'u32[]', space=smem, size = 0x4, offset = 0x4, fixed_abs, tag = 'smem constant byte address 0x4 - core index']
  #allocation1 [shape = 'u32[72,128]{1,0:T(1,128)}', space=vmem, size = 0x9000, scoped, tag = 'internal scratch']
  #allocation2 [shape = 'f32[8,32]{1,0:T(8,128)}', space=vmem, size = 0x1000, scoped, tag = 'scratch operand']
  #allocation3 [shape = 'f32[8,8]{1,0:T(8,128)}', space=vmem, size = 0x1000, scoped, tag = 'scratch operand']
  %s0 = inlined_call_operand.vmem [shape: bf16[2,8,32], index: 0, kind: input, shape index: {}]
  %s1 = inlined_call_operand.vmem [shape: bf16[1,32,32], index: 1, kind: input, shape index: {}]
  %s2 = inlined_call_operand.vmem [shape: bf16[1,32,32], index: 2, kind: input, shape index: {}]
  %s3 = inlined_call_operand.vmem [shape: bf16[1,32,32], index: 3, kind: input, shape index: {}]
  %s4 = inlined_call_operand.vmem [shape: bf16[1,32,32], index: 4, kind: input, shape index: {}]
  %s5 = inlined_call_operand.vmem [shape: f32[1,32], index: 5, kind: input, shape index: {}]
  %s6 = inlined_call_operand.vmem [shape: f32[8,32], index: 6, kind: input, shape index: {}]
  %s7 = inlined_call_operand.vmem [shape: f32[8,32], index: 7, kind: input, shape index: {}]
  %s8 = inlined_call_operand.vmem [shape: f32[32,32], index: 8, kind: input, shape index: {}]
  %s9 = inlined_call_operand.vmem [shape: f32[32,32], index: 9, kind: input, shape index: {}]
  %s10 = inlined_call_operand.vmem [shape: f32[1,32], index: 10, kind: input, shape index: {}]
  %s11 = inlined_call_operand.vmem [shape: bf16[2,8,32], index: 11, kind: output, shape index: {}]
  %s12 = sld [smem:[#allocation0]]
  $region85: #{_lambda_.5} parent=0
    _
  %s14 = ssub.s32 1, %s12
  %s15 = scalar_select 0, %s14, %s12
  loop: start=0, step=1, limit=4
  $region2: #{_lambda_.5} parent=0 // loop_pre_header
    _
  $region3: #{_lambda_.5} parent=0 // loop_header
    %s17 = sphi 0, %s21
    %p18 = scmp.ge.s32.totalorder %s17, 4
    %s24 = sphi 0, %s36
    %s25 = sphi 0, %s32
    %s26 = sphi 0, %s24
    %s27 = sphi 0, %s25
    %s28 = sphi 0, %s26
    %s29 = sphi 0, %s27
    %s39 = sphi 0, %s41
    %s42 = sphi 0, %s39
    %s43 = sphi 0, %s42
    %s59 = sphi 0, %s43
    %s65 = sphi 0, %s67
    %s68 = sphi 0, %s65
    %s69 = sphi 0, %s68
    %s85 = sphi 0, %s69
    %s91 = sphi 0, %s93
    %s94 = sphi 0, %s91
    %s95 = sphi 0, %s94
    %s111 = sphi 0, %s95
    %s117 = sphi 0, %s119
    %s120 = sphi 0, %s117
    %s121 = sphi 0, %s120
    %s137 = sphi 0, %s121
    %s143 = sphi 0, %s145
    %s146 = sphi 0, %s143
    %s147 = sphi 0, %s146
    %s163 = sphi 0, %s147
    %s167 = sphi 0, %s167
    %s169 = sphi 0, %s167
    %s170 = sphi 0, %s169
    %s184 = sphi 0, %s170
    %s188 = sphi 0, %s188
    %s190 = sphi 0, %s188
    %s191 = sphi 0, %s190
    %s205 = sphi 0, %s191
    %s209 = sphi 0, %s209
    %s211 = sphi 0, %s209
    %s212 = sphi 0, %s211
    %s226 = sphi 0, %s212
    %s230 = sphi 0, %s230
    %s232 = sphi 0, %s230
    %s233 = sphi 0, %s232
    %s247 = sphi 0, %s233
    %s251 = sphi 0, %s251
    %s253 = sphi 0, %s251
    %s254 = sphi 0, %s253
    %s268 = sphi 0, %s254
    %s272 = sphi 0, %s272
    %s274 = sphi 0, %s272
    %s275 = sphi 0, %s274
    %s289 = sphi 0, %s275
    %s295 = sphi 0, %s297
    %s298 = sphi 0, %s295
    %s299 = sphi 0, %s298
    %s315 = sphi 0, %s299
  $region4: #{_lambda_.5} parent=0 // loop_header_branch
    %20 = sbr.rel (%p18) target = $region8
  $region5: #{_lambda_.5} parent=0 // loop_body
    %s22 = ssub.s32 %s17, 1
    %s23 = ssub.s32 %s17, 2
    %s30 = sadd.s32 1, %s25
    %p31 = scmp.ge.s32.totalorder %s30, 1
    %s32 = scalar_select %p31, 0, %s30
    %s33 = sadd.s32 1, %s24
    %s34 = scalar_select %p31, %s33, %s24
    %p35 = scmp.ge.s32.totalorder %s34, 2
    %s36 = scalar_select %p35, 0, %s34
    %s37 = ssub.s32 %s24, %s36
    %p38 = scmp.eq.s32.totalorder %s37, 0
    %s40 = sadd.s32 %s39, 1
    %s41 = scalar_select %p38, %s39, %s40
    %p44 = pneg %p38
    %p45 = scmp.eq.s32.totalorder %s17, 1
    %p46 = por %p44, %p45
    %p47 = scmp.ne.s32.totalorder %s39, %s42
    %p48 = scmp.eq.s32.totalorder %s17, 0
    %p49 = por %p47, %p48
    %p50 = scmp.ne.s32.totalorder %s39, %s42
    %p51 = scmp.eq.s32.totalorder %s22, 1
    %p52 = por %p50, %p51
    %p53 = scmp.ne.s32.totalorder %s42, %s43
    %p54 = scmp.eq.s32.totalorder %s22, 0
    %p55 = por %p53, %p54
    %p56 = scmp.ne.s32.totalorder %s42, %s43
    %p57 = scmp.eq.s32.totalorder %s23, 1
    %p58 = por %p56, %p57
    %p60 = scmp.ne.s32.totalorder %s43, %s59
    %p61 = scmp.eq.s32.totalorder %s23, 0
    %p62 = por %p60, %p61
    %s63 = ssub.s32 %s25, %s32
    %p64 = scmp.eq.s32.totalorder %s63, 0
    %s66 = sadd.s32 %s65, 1
    %s67 = scalar_select %p64, %s65, %s66
    %p70 = pneg %p64
    %p71 = scmp.eq.s32.totalorder %s17, 1
    %p72 = por %p70, %p71
    %p73 = scmp.ne.s32.totalorder %s65, %s68
    %p74 = scmp.eq.s32.totalorder %s17, 0
    %p75 = por %p73, %p74
    %p76 = scmp.ne.s32.totalorder %s65, %s68
    %p77 = scmp.eq.s32.totalorder %s22, 1
    %p78 = por %p76, %p77
    %p79 = scmp.ne.s32.totalorder %s68, %s69
    %p80 = scmp.eq.s32.totalorder %s22, 0
    %p81 = por %p79, %p80
    %p82 = scmp.ne.s32.totalorder %s68, %s69
    %p83 = scmp.eq.s32.totalorder %s23, 1
    %p84 = por %p82, %p83
    %p86 = scmp.ne.s32.totalorder %s69, %s85
    %p87 = scmp.eq.s32.totalorder %s23, 0
    %p88 = por %p86, %p87
    %s89 = ssub.s32 %s25, %s32
    %p90 = scmp.eq.s32.totalorder %s89, 0
    %s92 = sadd.s32 %s91, 1
    %s93 = scalar_select %p90, %s91, %s92
    %p96 = pneg %p90
    %p97 = scmp.eq.s32.totalorder %s17, 1
    %p98 = por %p96, %p97
    %p99 = scmp.ne.s32.totalorder %s91, %s94
    %p100 = scmp.eq.s32.totalorder %s17, 0
    %p101 = por %p99, %p100
    %p102 = scmp.ne.s32.totalorder %s91, %s94
    %p103 = scmp.eq.s32.totalorder %s22, 1
    %p104 = por %p102, %p103
    %p105 = scmp.ne.s32.totalorder %s94, %s95
    %p106 = scmp.eq.s32.totalorder %s22, 0
    %p107 = por %p105, %p106
    %p108 = scmp.ne.s32.totalorder %s94, %s95
    %p109 = scmp.eq.s32.totalorder %s23, 1
    %p110 = por %p108, %p109
    %p112 = scmp.ne.s32.totalorder %s95, %s111
    %p113 = scmp.eq.s32.totalorder %s23, 0
    %p114 = por %p112, %p113
    %s115 = ssub.s32 %s25, %s32
    %p116 = scmp.eq.s32.totalorder %s115, 0
    %s118 = sadd.s32 %s117, 1
    %s119 = scalar_select %p116, %s117, %s118
    %p122 = pneg %p116
    %p123 = scmp.eq.s32.totalorder %s17, 1
    %p124 = por %p122, %p123
    %p125 = scmp.ne.s32.totalorder %s117, %s120
    %p126 = scmp.eq.s32.totalorder %s17, 0
    %p127 = por %p125, %p126
    %p128 = scmp.ne.s32.totalorder %s117, %s120
    %p129 = scmp.eq.s32.totalorder %s22, 1
    %p130 = por %p128, %p129
    %p131 = scmp.ne.s32.totalorder %s120, %s121
    %p132 = scmp.eq.s32.totalorder %s22, 0
    %p133 = por %p131, %p132
    %p134 = scmp.ne.s32.totalorder %s120, %s121
    %p135 = scmp.eq.s32.totalorder %s23, 1
    %p136 = por %p134, %p135
    %p138 = scmp.ne.s32.totalorder %s121, %s137
    %p139 = scmp.eq.s32.totalorder %s23, 0
    %p140 = por %p138, %p139
    %s141 = ssub.s32 %s25, %s32
    %p142 = scmp.eq.s32.totalorder %s141, 0
    %s144 = sadd.s32 %s143, 1
    %s145 = scalar_select %p142, %s143, %s144
    %p148 = pneg %p142
    %p149 = scmp.eq.s32.totalorder %s17, 1
    %p150 = por %p148, %p149
    %p151 = scmp.ne.s32.totalorder %s143, %s146
    %p152 = scmp.eq.s32.totalorder %s17, 0
    %p153 = por %p151, %p152
    %p154 = scmp.ne.s32.totalorder %s143, %s146
    %p155 = scmp.eq.s32.totalorder %s22, 1
    %p156 = por %p154, %p155
    %p157 = scmp.ne.s32.totalorder %s146, %s147
    %p158 = scmp.eq.s32.totalorder %s22, 0
    %p159 = por %p157, %p158
    %p160 = scmp.ne.s32.totalorder %s146, %s147
    %p161 = scmp.eq.s32.totalorder %s23, 1
    %p162 = por %p160, %p161
    %p164 = scmp.ne.s32.totalorder %s147, %s163
    %p165 = scmp.eq.s32.totalorder %s23, 0
    %p166 = por %p164, %p165
    %s168 = sadd.s32 %s167, 1
    %p171 = scmp.eq.s32.totalorder %s17, 1
    %p172 = scmp.ne.s32.totalorder %s167, %s169
    %p173 = scmp.eq.s32.totalorder %s17, 0
    %p174 = por %p172, %p173
    %p175 = scmp.ne.s32.totalorder %s167, %s169
    %p176 = scmp.eq.s32.totalorder %s22, 1
    %p177 = por %p175, %p176
    %p178 = scmp.ne.s32.totalorder %s169, %s170
    %p179 = scmp.eq.s32.totalorder %s22, 0
    %p180 = por %p178, %p179
    %p181 = scmp.ne.s32.totalorder %s169, %s170
    %p182 = scmp.eq.s32.totalorder %s23, 1
    %p183 = por %p181, %p182
    %p185 = scmp.ne.s32.totalorder %s170, %s184
    %p186 = scmp.eq.s32.totalorder %s23, 0
    %p187 = por %p185, %p186
    %s189 = sadd.s32 %s188, 1
    %p192 = scmp.eq.s32.totalorder %s17, 1
    %p193 = scmp.ne.s32.totalorder %s188, %s190
    %p194 = scmp.eq.s32.totalorder %s17, 0
    %p195 = por %p193, %p194
    %p196 = scmp.ne.s32.totalorder %s188, %s190
    %p197 = scmp.eq.s32.totalorder %s22, 1
    %p198 = por %p196, %p197
    %p199 = scmp.ne.s32.totalorder %s190, %s191
    %p200 = scmp.eq.s32.totalorder %s22, 0
    %p201 = por %p199, %p200
    %p202 = scmp.ne.s32.totalorder %s190, %s191
    %p203 = scmp.eq.s32.totalorder %s23, 1
    %p204 = por %p202, %p203
    %p206 = scmp.ne.s32.totalorder %s191, %s205
    %p207 = scmp.eq.s32.totalorder %s23, 0
    %p208 = por %p206, %p207
    %s210 = sadd.s32 %s209, 1
    %p213 = scmp.eq.s32.totalorder %s17, 1
    %p214 = scmp.ne.s32.totalorder %s209, %s211
    %p215 = scmp.eq.s32.totalorder %s17, 0
    %p216 = por %p214, %p215
    %p217 = scmp.ne.s32.totalorder %s209, %s211
    %p218 = scmp.eq.s32.totalorder %s22, 1
    %p219 = por %p217, %p218
    %p220 = scmp.ne.s32.totalorder %s211, %s212
    %p221 = scmp.eq.s32.totalorder %s22, 0
    %p222 = por %p220, %p221
    %p223 = scmp.ne.s32.totalorder %s211, %s212
    %p224 = scmp.eq.s32.totalorder %s23, 1
    %p225 = por %p223, %p224
    %p227 = scmp.ne.s32.totalorder %s212, %s226
    %p228 = scmp.eq.s32.totalorder %s23, 0
    %p229 = por %p227, %p228
    %s231 = sadd.s32 %s230, 1
    %p234 = scmp.eq.s32.totalorder %s17, 1
    %p235 = scmp.ne.s32.totalorder %s230, %s232
    %p236 = scmp.eq.s32.totalorder %s17, 0
    %p237 = por %p235, %p236
    %p238 = scmp.ne.s32.totalorder %s230, %s232
    %p239 = scmp.eq.s32.totalorder %s22, 1
    %p240 = por %p238, %p239
    %p241 = scmp.ne.s32.totalorder %s232, %s233
    %p242 = scmp.eq.s32.totalorder %s22, 0
    %p243 = por %p241, %p242
    %p244 = scmp.ne.s32.totalorder %s232, %s233
    %p245 = scmp.eq.s32.totalorder %s23, 1
    %p246 = por %p244, %p245
    %p248 = scmp.ne.s32.totalorder %s233, %s247
    %p249 = scmp.eq.s32.totalorder %s23, 0
    %p250 = por %p248, %p249
    %s252 = sadd.s32 %s251, 1
    %p255 = scmp.eq.s32.totalorder %s17, 1
    %p256 = scmp.ne.s32.totalorder %s251, %s253
    %p257 = scmp.eq.s32.totalorder %s17, 0
    %p258 = por %p256, %p257
    %p259 = scmp.ne.s32.totalorder %s251, %s253
    %p260 = scmp.eq.s32.totalorder %s22, 1
    %p261 = por %p259, %p260
    %p262 = scmp.ne.s32.totalorder %s253, %s254
    %p263 = scmp.eq.s32.totalorder %s22, 0
    %p264 = por %p262, %p263
    %p265 = scmp.ne.s32.totalorder %s253, %s254
    %p266 = scmp.eq.s32.totalorder %s23, 1
    %p267 = por %p265, %p266
    %p269 = scmp.ne.s32.totalorder %s254, %s268
    %p270 = scmp.eq.s32.totalorder %s23, 0
    %p271 = por %p269, %p270
    %s273 = sadd.s32 %s272, 1
    %p276 = scmp.eq.s32.totalorder %s17, 1
    %p277 = scmp.ne.s32.totalorder %s272, %s274
    %p278 = scmp.eq.s32.totalorder %s17, 0
    %p279 = por %p277, %p278
    %p280 = scmp.ne.s32.totalorder %s272, %s274
    %p281 = scmp.eq.s32.totalorder %s22, 1
    %p282 = por %p280, %p281
    %p283 = scmp.ne.s32.totalorder %s274, %s275
    %p284 = scmp.eq.s32.totalorder %s22, 0
    %p285 = por %p283, %p284
    %p286 = scmp.ne.s32.totalorder %s274, %s275
    %p287 = scmp.eq.s32.totalorder %s23, 1
    %p288 = por %p286, %p287
    %p290 = scmp.ne.s32.totalorder %s275, %s289
    %p291 = scmp.eq.s32.totalorder %s23, 0
    %p292 = por %p290, %p291
    %s293 = ssub.s32 %s24, %s36
    %p294 = scmp.eq.s32.totalorder %s293, 0
    %s296 = sadd.s32 %s295, 1
    %s297 = scalar_select %p294, %s295, %s296
    %p300 = pneg %p294
    %p301 = scmp.eq.s32.totalorder %s17, 1
    %p302 = por %p300, %p301
    %p303 = scmp.ne.s32.totalorder %s295, %s298
    %p304 = scmp.eq.s32.totalorder %s17, 0
    %p305 = por %p303, %p304
    %p306 = scmp.ne.s32.totalorder %s295, %s298
    %p307 = scmp.eq.s32.totalorder %s22, 1
    %p308 = por %p306, %p307
    %p309 = scmp.ne.s32.totalorder %s298, %s299
    %p310 = scmp.eq.s32.totalorder %s22, 0
    %p311 = por %p309, %p310
    %p312 = scmp.ne.s32.totalorder %s298, %s299
    %p313 = scmp.eq.s32.totalorder %s23, 1
    %p314 = por %p312, %p313
    %p316 = scmp.ne.s32.totalorder %s299, %s315
    %p317 = scmp.eq.s32.totalorder %s23, 0
    %p318 = por %p316, %p317
    %p319 = scmp.le.s32.totalorder 1, %s17
    %p320 = scmp.lt.s32.totalorder %s17, 3
    %p321 = pnand %p319, %p320
    %p322 = pneg %p321
    // Predicated region
    $region9: #{_lambda_.5} parent=5 // pred_check
      _
    $region10: #{_lambda_.5} parent=5 // pred_check_branch
      %324 = sbr.rel (%p321) target = $region12
    $region11: #{_lambda_.5} parent=5 // pred_region
      %s325 = ssub.s32 %s17, 1
      // Predicated region
      $region13: #{_lambda_.5} parent=11 // pred_check
        %p326 = pneg %p81
      $region14: #{_lambda_.5} parent=11 // pred_check_branch
        %328 = sbr.rel (%p326) target = $region16
      $region15: #{_lambda_.5} parent=11 // pred_region
        %p329 = scmp.lt.s32.totalorder %s27, 0
        %s330 = scalar_select %p329, %s27, 0
        %s331 = smul.addr %s330, 4
        %s332 = smul.addr %s331, 4
        %s333 = scalar_lea.vmem %s1, %s332
      $region16: #{_lambda_.5} parent=11 // pred_fallthru
        _
      // Predicated region
      $region17: #{_lambda_.5} parent=11 // pred_check
        %p334 = pneg %p107
      $region18: #{_lambda_.5} parent=11 // pred_check_branch
        %336 = sbr.rel (%p334) target = $region20
      $region19: #{_lambda_.5} parent=11 // pred_region
        %p337 = scmp.lt.s32.totalorder %s27, 0
        %s338 = scalar_select %p337, %s27, 0
        %s339 = smul.addr %s338, 4
        %s340 = smul.addr %s339, 4
        %s341 = scalar_lea.vmem %s2, %s340
      $region20: #{_lambda_.5} parent=11 // pred_fallthru
        _
      // Predicated region
      $region21: #{_lambda_.5} parent=11 // pred_check
        %p342 = pneg %p133
      $region22: #{_lambda_.5} parent=11 // pred_check_branch
        %344 = sbr.rel (%p342) target = $region24
      $region23: #{_lambda_.5} parent=11 // pred_region
        %p345 = scmp.lt.s32.totalorder %s27, 0
        %s346 = scalar_select %p345, %s27, 0
        %s347 = smul.addr %s346, 4
        %s348 = smul.addr %s347, 4
        %s349 = scalar_lea.vmem %s3, %s348
      $region24: #{_lambda_.5} parent=11 // pred_fallthru
        _
      // Predicated region
      $region25: #{_lambda_.5} parent=11 // pred_check
        %p350 = pneg %p159
      $region26: #{_lambda_.5} parent=11 // pred_check_branch
        %352 = sbr.rel (%p350) target = $region28
      $region27: #{_lambda_.5} parent=11 // pred_region
        %p353 = scmp.lt.s32.totalorder %s27, 0
        %s354 = scalar_select %p353, %s27, 0
        %s355 = smul.addr %s354, 4
        %s356 = smul.addr %s355, 4
        %s357 = scalar_lea.vmem %s4, %s356
      $region28: #{_lambda_.5} parent=11 // pred_fallthru
        _
      // Predicated region
      $region29: #{_lambda_.5} parent=11 // pred_check
        %p358 = pneg %p180
      $region30: #{_lambda_.5} parent=11 // pred_check_branch
        %360 = sbr.rel (%p358) target = $region32
      $region31: #{_lambda_.5} parent=11 // pred_region
        _
      $region32: #{_lambda_.5} parent=11 // pred_fallthru
        _
      // Predicated region
      $region33: #{_lambda_.5} parent=11 // pred_check
        %p361 = pneg %p201
      $region34: #{_lambda_.5} parent=11 // pred_check_branch
        %363 = sbr.rel (%p361) target = $region36
      $region35: #{_lambda_.5} parent=11 // pred_region
        _
      $region36: #{_lambda_.5} parent=11 // pred_fallthru
        _
      // Predicated region
      $region37: #{_lambda_.5} parent=11 // pred_check
        %p364 = pneg %p222
      $region38: #{_lambda_.5} parent=11 // pred_check_branch
        %366 = sbr.rel (%p364) target = $region40
      $region39: #{_lambda_.5} parent=11 // pred_region
        _
      $region40: #{_lambda_.5} parent=11 // pred_fallthru
        _
      // Predicated region
      $region41: #{_lambda_.5} parent=11 // pred_check
        %p367 = pneg %p243
      $region42: #{_lambda_.5} parent=11 // pred_check_branch
        %369 = sbr.rel (%p367) target = $region44
      $region43: #{_lambda_.5} parent=11 // pred_region
        _
      $region44: #{_lambda_.5} parent=11 // pred_fallthru
        _
      // Predicated region
      $region45: #{_lambda_.5} parent=11 // pred_check
        %p370 = pneg %p264
      $region46: #{_lambda_.5} parent=11 // pred_check_branch
        %372 = sbr.rel (%p370) target = $region48
      $region47: #{_lambda_.5} parent=11 // pred_region
        _
      $region48: #{_lambda_.5} parent=11 // pred_fallthru
        _
      // Predicated region
      $region49: #{_lambda_.5} parent=11 // pred_check
        %p373 = pneg %p285
      $region50: #{_lambda_.5} parent=11 // pred_check_branch
        %375 = sbr.rel (%p373) target = $region52
      $region51: #{_lambda_.5} parent=11 // pred_region
        _
      $region52: #{_lambda_.5} parent=11 // pred_fallthru
        _
    $region12: #{_lambda_.5} parent=5 // pred_fallthru
      _
    %p376 = scmp.lt.s32.totalorder %s17, 2
    // Predicated region
    $region53: #{_lambda_.5} parent=5 // pred_check
      %p377 = pneg %p376
    $region54: #{_lambda_.5} parent=5 // pred_check_branch
      %379 = sbr.rel (%p377) target = $region56
    $region55: #{_lambda_.5} parent=5 // pred_region
      // Predicated region
      $region57: #{_lambda_.5} parent=55 // pred_check
        %p380 = pneg %p49
      $region58: #{_lambda_.5} parent=55 // pred_check_branch
        %382 = sbr.rel (%p380) target = $region60
      $region59: #{_lambda_.5} parent=55 // pred_region
        %p383 = scmp.lt.s32.totalorder %s24, 1
        %s384 = scalar_select %p383, %s24, 1
        %s385 = smul.addr %s384, 4
        %s386 = scalar_lea.vmem %s0, %s385
      $region60: #{_lambda_.5} parent=55 // pred_fallthru
        _
    $region56: #{_lambda_.5} parent=5 // pred_fallthru
      _
    %p387 = scmp.le.s32.totalorder 1, %s17
    %p388 = scmp.lt.s32.totalorder %s17, 3
    %p389 = pnand %p387, %p388
    %p390 = pneg %p389
    // Predicated region
    $region61: #{_lambda_.5} parent=5 // pred_check
      _
    $region62: #{_lambda_.5} parent=5 // pred_check_branch
      %392 = sbr.rel (%p389) target = $region64
    $region63: #{_lambda_.5} parent=5 // pred_region
      %s393 = ssub.s32 %s17, 1
      %p394 = scmp.lt.s32.totalorder %s26, 1
      %s395 = scalar_select %p394, %s26, 1
      %s396 = smul.addr %s395, 4
      %s397 = scalar_lea.vmem %s0, %s396
      %p398 = pneg %p55
      %p399 = pneg %p52
      %p400 = scmp.lt.s32.totalorder %s27, 0
      %s401 = scalar_select %p400, %s27, 0
      %s402 = smul.addr %s401, 4
      %s403 = smul.addr %s402, 4
      %s404 = scalar_lea.vmem %s1, %s403
      %p405 = pneg %p81
      %p406 = pneg %p78
      %p407 = scmp.lt.s32.totalorder %s27, 0
      %s408 = scalar_select %p407, %s27, 0
      %s409 = smul.addr %s408, 4
      %s410 = smul.addr %s409, 4
      %s411 = scalar_lea.vmem %s2, %s410
      %p412 = pneg %p107
      %p413 = pneg %p104
      %p414 = scmp.lt.s32.totalorder %s27, 0
      %s415 = scalar_select %p414, %s27, 0
      %s416 = smul.addr %s415, 4
      %s417 = smul.addr %s416, 4
      %s418 = scalar_lea.vmem %s3, %s417
      %p419 = pneg %p133
      %p420 = pneg %p130
      %p421 = scmp.lt.s32.totalorder %s27, 0
      %s422 = scalar_select %p421, %s27, 0
      %s423 = smul.addr %s422, 4
      %s424 = smul.addr %s423, 4
      %s425 = scalar_lea.vmem %s4, %s424
      %p426 = pneg %p159
      %p427 = pneg %p156
      %p428 = pneg %p180
      %p429 = pneg %p177
      %p430 = pneg %p201
      %p431 = pneg %p198
      %p432 = pneg %p222
      %p433 = pneg %p219
      %p434 = pneg %p243
      %p435 = pneg %p240
      %p436 = pneg %p264
      %p437 = pneg %p261
      %p438 = pneg %p285
      %p439 = pneg %p282
      %p440 = pneg %p311
      %p441 = pneg %p308
      %p442 = scmp.lt.s32.totalorder %s26, 1
      %s443 = scalar_select %p442, %s26, 1
      %s444 = smul.addr %s443, 4
      %s445 = scalar_lea.vmem %s11, %s444
      %p446 = scmp.lt.s32.totalorder %s26, 1
      %s447 = scalar_select %p446, %s26, 1
      %s448 = smul.addr %s447, 4
      %s449 = scalar_lea.vmem %s0, %s448
      %p450 = scmp.lt.s32.totalorder %s27, 0
      %s451 = scalar_select %p450, %s27, 0
      %s452 = smul.addr %s451, 4
      %s453 = smul.addr %s452, 4
      %s454 = scalar_lea.vmem %s1, %s453
      %p455 = scmp.lt.s32.totalorder %s27, 0
      %s456 = scalar_select %p455, %s27, 0
      %s457 = smul.addr %s456, 4
      %s458 = smul.addr %s457, 4
      %s459 = scalar_lea.vmem %s2, %s458
      %p460 = scmp.lt.s32.totalorder %s27, 0
      %s461 = scalar_select %p460, %s27, 0
      %s462 = smul.addr %s461, 4
      %s463 = smul.addr %s462, 4
      %s464 = scalar_lea.vmem %s3, %s463
      %p465 = scmp.lt.s32.totalorder %s27, 0
      %s466 = scalar_select %p465, %s27, 0
      %s467 = smul.addr %s466, 4
      %s468 = smul.addr %s467, 4
      %s469 = scalar_lea.vmem %s4, %s468
      %p470 = scmp.lt.s32.totalorder %s26, 1
      %s471 = scalar_select %p470, %s26, 1
      %s472 = smul.addr %s471, 4
      %s473 = scalar_lea.vmem %s11, %s472
      %p475 = scmp.eq.s32.totalorder %s27, 0
      // Predicated region
      $region65: #{_lambda_.5} parent=63 // pred_check
        %p476 = pneg %p475
      $region66: #{_lambda_.5} parent=63 // pred_check_branch
        %478 = sbr.rel (%p476) target = $region68
      $region67: #{_lambda_.5} parent=63 // pred_region
        %vm479 = vcmask 261120
        %480 = vst.msk [vmem:[#allocation2] sm:$0xff] %vm479, 0.0
        %v481 = vlaneseq
        %v482 = vshrl.u32 %v481, 7
        %v483 = vlaneseq
        %v484 = vand.u32 %v483, 127
        %vm485 = vcmp.le.s32.totalorder %v484, %v482
        %v486 = vsel %vm485, 0.0, -inf
        %vm487 = vcmask 64512
        %488 = vst.msk [vmem:[#allocation3] sm:$0xff] %vm487, %v486
      $region68: #{_lambda_.5} parent=63 // pred_fallthru
        _
      %v489 = vld [vmem:[%s449] sm:$0xf]
      %v490 = vld [vmem:[%s454] sm:$0xf]
      %v491 = vld [vmem:[%s454 + $0x4] sm:$0xf]
      %v492 = vld [vmem:[%s454 + $0x8] sm:$0xf]
      %v493 = vld [vmem:[%s454 + $0xc] sm:$0xf]
      %v498 = vunpack.c.l.b16 %v490
      %v499 = vunpack.c.l.b16 %v491
      %v500 = vunpack.c.l.b16 %v492
      %v501 = vunpack.c.l.b16 %v493
      %v502 = vpack.c.b16 %v499, %v498
      %v503 = vpack.c.b16 %v501, %v500
      %vm506 = vcmask 261120
      %v508 = vsel %vm506, %v489, 0
      %510 = vmatpush.bf16.msra.mxu0 0
      %511 = vmatpush.bf16.msra.mxu0 0
      %512 = vmatpush.bf16.msra.mxu0 0
      %513 = vmatpush.bf16.msra.mxu0 0
      %514 = vmatpush.bf16.msra.mxu0 0
      %515 = vmatpush.bf16.msra.mxu0 0
      %516 = vmatpush.bf16.msra.mxu0 %v503
      %517 = vmatpush.bf16.msra.mxu0 %v502
      %518 = vmatmul.bf16.gmra.mxu0 %v508
      %v519 = vpop.f32.mrf.mxu0
      %v520 = vadd.f32 0.0, %v519
      %v521 = vpop.f32.mrf.mxu0
      %522 = vdwg.mxu0
      %v523 = vld [vmem:[%s459] sm:$0xf]
      %v524 = vld [vmem:[%s459 + $0x4] sm:$0xf]
      %v525 = vld [vmem:[%s459 + $0x8] sm:$0xf]
      %v526 = vld [vmem:[%s459 + $0xc] sm:$0xf]
      %v531 = vunpack.c.l.b16 %v523
      %v532 = vunpack.c.l.b16 %v524
      %v533 = vunpack.c.l.b16 %v525
      %v534 = vunpack.c.l.b16 %v526
      %v535 = vpack.c.b16 %v532, %v531
      %v536 = vpack.c.b16 %v534, %v533
      %539 = vmatpush.bf16.msra.mxu0 0
      %540 = vmatpush.bf16.msra.mxu0 0
      %541 = vmatpush.bf16.msra.mxu0 0
      %542 = vmatpush.bf16.msra.mxu0 0
      %543 = vmatpush.bf16.msra.mxu0 0
      %544 = vmatpush.bf16.msra.mxu0 0
      %545 = vmatpush.bf16.msra.mxu0 %v536
      %546 = vmatpush.bf16.msra.mxu0 %v535
      %547 = vmatmul.bf16.gmra.mxu0 %v508
      %v548 = vpop.f32.mrf.mxu0
      %v549 = vadd.f32 0.0, %v548
      %v550 = vpop.f32.mrf.mxu0
      %551 = vdwg.mxu0
      %v552 = vld [vmem:[%s464] sm:$0xf]
      %v553 = vld [vmem:[%s464 + $0x4] sm:$0xf]
      %v554 = vld [vmem:[%s464 + $0x8] sm:$0xf]
      %v555 = vld [vmem:[%s464 + $0xc] sm:$0xf]
      %v560 = vunpack.c.l.b16 %v552
      %v561 = vunpack.c.l.b16 %v553
      %v562 = vunpack.c.l.b16 %v554
      %v563 = vunpack.c.l.b16 %v555
      %v564 = vpack.c.b16 %v561, %v560
      %v565 = vpack.c.b16 %v563, %v562
      %568 = vmatpush.bf16.msra.mxu0 0
      %569 = vmatpush.bf16.msra.mxu0 0
      %570 = vmatpush.bf16.msra.mxu0 0
      %571 = vmatpush.bf16.msra.mxu0 0
      %572 = vmatpush.bf16.msra.mxu0 0
      %573 = vmatpush.bf16.msra.mxu0 0
      %574 = vmatpush.bf16.msra.mxu0 %v565
      %575 = vmatpush.bf16.msra.mxu0 %v564
      %576 = vmatmul.bf16.gmra.mxu0 %v508
      %v577 = vpop.f32.mrf.mxu0
      %v578 = vadd.f32 0.0, %v577
      %v579 = vpop.f32.mrf.mxu0
      %580 = vdwg.mxu0
      %v581 = vld [vmem:[%s9] sm:$0xff]
      %v582 = vld [vmem:[%s9 + $0x8] sm:$0xff]
      %v583 = vld [vmem:[%s9 + $0x10] sm:$0xff]
      %v584 = vld [vmem:[%s9 + $0x18] sm:$0xff]
      %v585 = vmul.f32 %v520, %v520
      %v587 = vsel %vm506, %v585, 0
      %589 = vmatpush.msra.mxu0 0.0
      %590 = vmatpush.msra.mxu0 0.0
      %591 = vmatpush.msra.mxu0 0.0
      %592 = vmatpush.msra.mxu0 0.0
      %593 = vmatpush.msra.mxu0 0.0
      %594 = vmatpush.msra.mxu0 0.0
      %595 = vmatpush.msra.mxu0 0.0
      %596 = vmatpush.msra.mxu0 0.0
      %597 = vmatpush.msra.mxu0 0.0
      %598 = vmatpush.msra.mxu0 0.0
      %599 = vmatpush.msra.mxu0 0.0
      %600 = vmatpush.msra.mxu0 0.0
      %601 = vmatpush.msra.mxu0 %v584
      %602 = vmatpush.msra.mxu0 %v583
      %603 = vmatpush.msra.mxu0 %v582
      %604 = vmatpush.msra.mxu0 %v581
      %605 = vmatmul.f32.gmra.mxu0 %v587
      %v606 = vpop.f32.mrf.mxu0
      %v607 = vadd.f32 0.0, %v606
      %608 = vdwg.mxu0
      %v609 = vmul.f32 %v549, %v549
      %v611 = vsel %vm506, %v609, 0
      %613 = vmatpush.msra.mxu0 0.0
      %614 = vmatpush.msra.mxu0 0.0
      %615 = vmatpush.msra.mxu0 0.0
      %616 = vmatpush.msra.mxu0 0.0
      %617 = vmatpush.msra.mxu0 0.0
      %618 = vmatpush.msra.mxu0 0.0
      %619 = vmatpush.msra.mxu0 0.0
      %620 = vmatpush.msra.mxu0 0.0
      %621 = vmatpush.msra.mxu0 0.0
      %622 = vmatpush.msra.mxu0 0.0
      %623 = vmatpush.msra.mxu0 0.0
      %624 = vmatpush.msra.mxu0 0.0
      %625 = vmatpush.msra.mxu0 %v584
      %626 = vmatpush.msra.mxu0 %v583
      %627 = vmatpush.msra.mxu0 %v582
      %628 = vmatpush.msra.mxu0 %v581
      %629 = vmatmul.f32.gmra.mxu0 %v611
      %v630 = vpop.f32.mrf.mxu0
      %v631 = vadd.f32 0.0, %v630
      %632 = vdwg.mxu0
      %v633 = vld [vmem:[%s5] sm:$0x1]
      %v634 = vmax.f32 %v607, 1e-24
      %v635 = vrsqrt.pop %v634
      %v636 = vmul.f32 %v635, %v634
      %v637 = vmul.f32 %v636, %v635
      %v638 = vmul.f32 0.5, %v637
      %v639 = vsub.f32 1.5, %v638
      %v640 = vmul.f32 %v635, %v639
      %vm641 = vweird.f32 %v634
      %vm642 = vweird.f32 %v635
      %vm643 = vmor %vm641, %vm642
      %v644 = vsel %vm643, %v635, %v640
      %v645 = vmul.f32 %v520, %v644
      %v646 = vmul.f32 %v633, 2.828427
      %v648 = vperm.slane %v646, 0
      %v650 = vmul.f32 %v645, %v648
      %v651 = vmax.f32 %v631, 1e-24
      %v652 = vrsqrt.pop %v651
      %v653 = vmul.f32 %v652, %v651
      %v654 = vmul.f32 %v653, %v652
      %v655 = vmul.f32 0.5, %v654
      %v656 = vsub.f32 1.5, %v655
      %v657 = vmul.f32 %v652, %v656
      %vm658 = vweird.f32 %v651
      %vm659 = vweird.f32 %v652
      %vm660 = vmor %vm658, %vm659
      %v661 = vsel %vm660, %v652, %v657
      %v662 = vmul.f32 %v549, %v661
      %v664 = vperm.slane %v633, 0
      %v666 = vmul.f32 %v662, %v664
      %v667 = vld [vmem:[%s6] sm:$0xff]
      %v668 = vld [vmem:[%s7] sm:$0xff]
      %v669 = vld [vmem:[%s8] sm:$0xff]
      %v670 = vld [vmem:[%s8 + $0x8] sm:$0xff]
      %v671 = vld [vmem:[%s8 + $0x10] sm:$0xff]
      %v672 = vld [vmem:[%s8 + $0x18] sm:$0xff]
      %v673 = vmul.f32 %v650, %v667
      %v675 = vsel %vm506, %v650, 0
      %677 = vmatpush.msra.mxu0 0.0
      %678 = vmatpush.msra.mxu0 0.0
      %679 = vmatpush.msra.mxu0 0.0
      %680 = vmatpush.msra.mxu0 0.0
      %681 = vmatpush.msra.mxu0 0.0
      %682 = vmatpush.msra.mxu0 0.0
      %683 = vmatpush.msra.mxu0 0.0
      %684 = vmatpush.msra.mxu0 0.0
      %685 = vmatpush.msra.mxu0 0.0
      %686 = vmatpush.msra.mxu0 0.0
      %687 = vmatpush.msra.mxu0 0.0
      %688 = vmatpush.msra.mxu0 0.0
      %689 = vmatpush.msra.mxu0 %v672
      %690 = vmatpush.msra.mxu0 %v671
      %691 = vmatpush.msra.mxu0 %v670
      %692 = vmatpush.msra.mxu0 %v669
      %693 = vmatmul.f32.gmra.mxu0 %v675
      %v694 = vpop.f32.mrf.mxu0
      %v695 = vadd.f32 0.0, %v694
      %696 = vdwg.mxu0
      %v697 = vmul.f32 %v695, %v668
      %v698 = vadd.f32 %v673, %v697
      %v699 = vmul.f32 %v666, %v667
      %v701 = vsel %vm506, %v666, 0
      %703 = vmatpush.msra.mxu0 0.0
      %704 = vmatpush.msra.mxu0 0.0
      %705 = vmatpush.msra.mxu0 0.0
      %706 = vmatpush.msra.mxu0 0.0
      %707 = vmatpush.msra.mxu0 0.0
      %708 = vmatpush.msra.mxu0 0.0
      %709 = vmatpush.msra.mxu0 0.0
      %710 = vmatpush.msra.mxu0 0.0
      %711 = vmatpush.msra.mxu0 0.0
      %712 = vmatpush.msra.mxu0 0.0
      %713 = vmatpush.msra.mxu0 0.0
      %714 = vmatpush.msra.mxu0 0.0
      %715 = vmatpush.msra.mxu0 %v672
      %716 = vmatpush.msra.mxu0 %v671
      %717 = vmatpush.msra.mxu0 %v670
      %718 = vmatpush.msra.mxu0 %v669
      %719 = vmatmul.f32.gmra.mxu0 %v701
      %v720 = vpop.f32.mrf.mxu0
      %v721 = vadd.f32 0.0, %v720
      %722 = vdwg.mxu0
      %v723 = vmul.f32 %v721, %v668
      %v724 = vadd.f32 %v699, %v723
      %v725 = vld [vmem:[#allocation3] sm:$0xff]
      %v726 = vpack.c.bf16 %v578, %v578
      %v727 = vld [vmem:[%s469] sm:$0xf]
      %v728 = vld [vmem:[%s469 + $0x4] sm:$0xf]
      %v729 = vld [vmem:[%s469 + $0x8] sm:$0xf]
      %v730 = vld [vmem:[%s469 + $0xc] sm:$0xf]
      %vm731 = vcmask 64512
      %v733 = vsel %vm731, %v698, 0
      %v736 = vsel %vm731, %v724, 0
      %738 = vmatpush.xpose.msra.mxu0 0.0
      %739 = vmatpush.xpose.msra.mxu0 0.0
      %740 = vmatpush.xpose.msra.mxu0 0.0
      %741 = vmatpush.xpose.msra.mxu0 0.0
      %742 = vmatpush.xpose.msra.mxu0 0.0
      %743 = vmatpush.xpose.msra.mxu0 0.0
      %744 = vmatpush.xpose.msra.mxu0 0.0
      %745 = vmatpush.xpose.msra.mxu0 0.0
      %746 = vmatpush.xpose.msra.mxu0 0.0
      %747 = vmatpush.xpose.msra.mxu0 0.0
      %748 = vmatpush.xpose.msra.mxu0 0.0
      %749 = vmatpush.xpose.msra.mxu0 0.0
      %750 = vmatpush.xpose.msra.mxu0 0.0
      %751 = vmatpush.xpose.msra.mxu0 0.0
      %752 = vmatpush.xpose.msra.mxu0 0.0
      %753 = vmatpush.xpose.msra.mxu0 %v736
      %754 = vmatmul.f32.gmra.mxu0 %v733
      %v755 = vpop.f32.mrf.mxu0
      %v756 = vadd.f32 %v725, %v755
      %757 = vdwg.mxu0
      %v758 = vsel %vm731, %v756, -inf
      %759 = vmax.xlane.f32.xlu0 %v758
      %v760 = vpop.xlane.xlu0 %759
      %v761 = vsub.f32 %v756, %v760
      %v762 = vmul.f32 %v761, 1.442695
      %v763 = vpow.pop %v762
      %v764 = vsel %vm731, %v763, 0.0
      %765 = vadd.xlane.f32.xlu0 %v764
      %v766 = vpop.xlane.xlu0 %765
      %v767 = vrcp.pop %v766
      %v768 = vmul.f32 %v763, %v767
      %v769 = vpack.c.bf16 %v768, %v768
      %v771 = vsel %vm731, %v769, 0
      %vm773 = vcmask 1043456
      %v775 = vsel %vm773, %v726, 0
      %777 = vmatpush.bf16.msra.mxu0 0
      %778 = vmatpush.bf16.msra.mxu0 0
      %779 = vmatpush.bf16.msra.mxu0 0
      %780 = vmatpush.bf16.msra.mxu0 0
      %781 = vmatpush.bf16.msra.mxu0 0
      %782 = vmatpush.bf16.msra.mxu0 0
      %783 = vmatpush.bf16.msra.mxu0 0
      %784 = vmatpush.bf16.msra.mxu0 %v775
      %785 = vmatmul.bf16.gmra.mxu0 %v771
      %v786 = vpop.f32.mrf.mxu0
      %v787 = vadd.f32 0.0, %v786
      %v788 = vpop.f32.mrf.mxu0
      %789 = vdwg.mxu0
      %790 = vrot.lane.b32.xlu0 %v698, 120
      %v791 = vpop.permute.xlu0 %790
      %792 = vrot.lane.b32.xlu0 %v724, 120
      %v793 = vpop.permute.xlu0 %792
      %v794 = vsel %vm731, %v791, 0
      %v796 = vsel %vm731, %v793, 0
      %798 = vmatpush.xpose.msra.mxu0 0.0
      %799 = vmatpush.xpose.msra.mxu0 0.0
      %800 = vmatpush.xpose.msra.mxu0 0.0
      %801 = vmatpush.xpose.msra.mxu0 0.0
      %802 = vmatpush.xpose.msra.mxu0 0.0
      %803 = vmatpush.xpose.msra.mxu0 0.0
      %804 = vmatpush.xpose.msra.mxu0 0.0
      %805 = vmatpush.xpose.msra.mxu0 0.0
      %806 = vmatpush.xpose.msra.mxu0 0.0
      %807 = vmatpush.xpose.msra.mxu0 0.0
      %808 = vmatpush.xpose.msra.mxu0 0.0
      %809 = vmatpush.xpose.msra.mxu0 0.0
      %810 = vmatpush.xpose.msra.mxu0 0.0
      %811 = vmatpush.xpose.msra.mxu0 0.0
      %812 = vmatpush.xpose.msra.mxu0 0.0
      %813 = vmatpush.xpose.msra.mxu0 %v796
      %814 = vmatmul.f32.gmra.mxu0 %v794
      %v815 = vpop.f32.mrf.mxu0
      %v816 = vadd.f32 %v725, %v815
      %817 = vdwg.mxu0
      %v818 = vsel %vm731, %v816, -inf
      %819 = vmax.xlane.f32.xlu0 %v818
      %v820 = vpop.xlane.xlu0 %819
      %v821 = vsub.f32 %v816, %v820
      %v822 = vmul.f32 %v821, 1.442695
      %v823 = vpow.pop %v822
      %v824 = vsel %vm731, %v823, 0.0
      %825 = vadd.xlane.f32.xlu0 %v824
      %v826 = vpop.xlane.xlu0 %825
      %v827 = vrcp.pop %v826
      %v828 = vmul.f32 %v823, %v827
      %v829 = vpack.c.bf16 %v828, %v828
      %v831 = vunpack.c.l.b16 %v726
      %v832 = vpack.c.b16 %v831, %v831
      %833 = vrot.lane.b32.xlu0 %v832, 120
      %v834 = vpop.permute.xlu0 %833
      %v836 = vsel %vm731, %v829, 0
      %v839 = vsel %vm773, %v834, 0
      %841 = vmatpush.bf16.msra.mxu0 0
      %842 = vmatpush.bf16.msra.mxu0 0
      %843 = vmatpush.bf16.msra.mxu0 0
      %844 = vmatpush.bf16.msra.mxu0 0
      %845 = vmatpush.bf16.msra.mxu0 0
      %846 = vmatpush.bf16.msra.mxu0 0
      %847 = vmatpush.bf16.msra.mxu0 0
      %848 = vmatpush.bf16.msra.mxu0 %v839
      %849 = vmatmul.bf16.gmra.mxu0 %v836
      %v850 = vpop.f32.mrf.mxu0
      %v851 = vadd.f32 0.0, %v850
      %v852 = vpop.f32.mrf.mxu0
      %853 = vdwg.mxu0
      %854 = vrot.lane.b32.xlu0 %v698, 112
      %v855 = vpop.permute.xlu0 %854
      %856 = vrot.lane.b32.xlu0 %v724, 112
      %v857 = vpop.permute.xlu0 %856
      %v858 = vsel %vm731, %v855, 0
      %v860 = vsel %vm731, %v857, 0
      %862 = vmatpush.xpose.msra.mxu0 0.0
      %863 = vmatpush.xpose.msra.mxu0 0.0
      %864 = vmatpush.xpose.msra.mxu0 0.0
      %865 = vmatpush.xpose.msra.mxu0 0.0
      %866 = vmatpush.xpose.msra.mxu0 0.0
      %867 = vmatpush.xpose.msra.mxu0 0.0
      %868 = vmatpush.xpose.msra.mxu0 0.0
      %869 = vmatpush.xpose.msra.mxu0 0.0
      %870 = vmatpush.xpose.msra.mxu0 0.0
      %871 = vmatpush.xpose.msra.mxu0 0.0
      %872 = vmatpush.xpose.msra.mxu0 0.0
      %873 = vmatpush.xpose.msra.mxu0 0.0
      %874 = vmatpush.xpose.msra.mxu0 0.0
      %875 = vmatpush.xpose.msra.mxu0 0.0
      %876 = vmatpush.xpose.msra.mxu0 0.0
      %877 = vmatpush.xpose.msra.mxu0 %v860
      %878 = vmatmul.f32.gmra.mxu0 %v858
      %v879 = vpop.f32.mrf.mxu0
      %v880 = vadd.f32 %v725, %v879
      %881 = vdwg.mxu0
      %v882 = vsel %vm731, %v880, -inf
      %883 = vmax.xlane.f32.xlu0 %v882
      %v884 = vpop.xlane.xlu0 %883
      %v885 = vsub.f32 %v880, %v884
      %v886 = vmul.f32 %v885, 1.442695
      %v887 = vpow.pop %v886
      %v888 = vsel %vm731, %v887, 0.0
      %889 = vadd.xlane.f32.xlu0 %v888
      %v890 = vpop.xlane.xlu0 %889
      %v891 = vrcp.pop %v890
      %v892 = vmul.f32 %v887, %v891
      %v893 = vpack.c.bf16 %v892, %v892
      %894 = vrot.lane.b32.xlu0 %v832, 112
      %v895 = vpop.permute.xlu0 %894
      %v897 = vsel %vm731, %v893, 0
      %v900 = vsel %vm773, %v895, 0
      %902 = vmatpush.bf16.msra.mxu0 0
      %903 = vmatpush.bf16.msra.mxu0 0
      %904 = vmatpush.bf16.msra.mxu0 0
      %905 = vmatpush.bf16.msra.mxu0 0
      %906 = vmatpush.bf16.msra.mxu0 0
      %907 = vmatpush.bf16.msra.mxu0 0
      %908 = vmatpush.bf16.msra.mxu0 0
      %909 = vmatpush.bf16.msra.mxu0 %v900
      %910 = vmatmul.bf16.gmra.mxu0 %v897
      %v911 = vpop.f32.mrf.mxu0
      %v912 = vadd.f32 0.0, %v911
      %v913 = vpop.f32.mrf.mxu0
      %914 = vdwg.mxu0
      %915 = vrot.lane.b32.xlu0 %v698, 104
      %v916 = vpop.permute.xlu0 %915
      %917 = vrot.lane.b32.xlu0 %v724, 104
      %v918 = vpop.permute.xlu0 %917
      %v919 = vsel %vm731, %v916, 0
      %v921 = vsel %vm731, %v918, 0
      %923 = vmatpush.xpose.msra.mxu0 0.0
      %924 = vmatpush.xpose.msra.mxu0 0.0
      %925 = vmatpush.xpose.msra.mxu0 0.0
      %926 = vmatpush.xpose.msra.mxu0 0.0
      %927 = vmatpush.xpose.msra.mxu0 0.0
      %928 = vmatpush.xpose.msra.mxu0 0.0
      %929 = vmatpush.xpose.msra.mxu0 0.0
      %930 = vmatpush.xpose.msra.mxu0 0.0
      %931 = vmatpush.xpose.msra.mxu0 0.0
      %932 = vmatpush.xpose.msra.mxu0 0.0
      %933 = vmatpush.xpose.msra.mxu0 0.0
      %934 = vmatpush.xpose.msra.mxu0 0.0
      %935 = vmatpush.xpose.msra.mxu0 0.0
      %936 = vmatpush.xpose.msra.mxu0 0.0
      %937 = vmatpush.xpose.msra.mxu0 0.0
      %938 = vmatpush.xpose.msra.mxu0 %v921
      %939 = vmatmul.f32.gmra.mxu0 %v919
      %v940 = vpop.f32.mrf.mxu0
      %v941 = vadd.f32 %v725, %v940
      %942 = vdwg.mxu0
      %v943 = vsel %vm731, %v941, -inf
      %944 = vmax.xlane.f32.xlu0 %v943
      %v945 = vpop.xlane.xlu0 %944
      %v946 = vsub.f32 %v941, %v945
      %v947 = vmul.f32 %v946, 1.442695
      %v948 = vpow.pop %v947
      %v949 = vsel %vm731, %v948, 0.0
      %950 = vadd.xlane.f32.xlu0 %v949
      %v951 = vpop.xlane.xlu0 %950
      %v952 = vrcp.pop %v951
      %v953 = vmul.f32 %v948, %v952
      %v954 = vpack.c.bf16 %v953, %v953
      %955 = vrot.lane.b32.xlu0 %v832, 104
      %v956 = vpop.permute.xlu0 %955
      %v958 = vsel %vm731, %v954, 0
      %v961 = vsel %vm773, %v956, 0
      %963 = vmatpush.bf16.msra.mxu0 0
      %964 = vmatpush.bf16.msra.mxu0 0
      %965 = vmatpush.bf16.msra.mxu0 0
      %966 = vmatpush.bf16.msra.mxu0 0
      %967 = vmatpush.bf16.msra.mxu0 0
      %968 = vmatpush.bf16.msra.mxu0 0
      %969 = vmatpush.bf16.msra.mxu0 0
      %970 = vmatpush.bf16.msra.mxu0 %v961
      %971 = vmatmul.bf16.gmra.mxu0 %v958
      %v972 = vpop.f32.mrf.mxu0
      %v973 = vadd.f32 0.0, %v972
      %v974 = vpop.f32.mrf.mxu0
      %975 = vdwg.mxu0
      %v976 = vpack.c.bf16 %v787, %v787
      %v977 = vpack.c.bf16 %v851, %v851
      %v979 = vsel %vm731, %v977, 0
      %v982 = vsel %vm773, %v728, 0
      %984 = vmatpush.bf16.msra.mxu0 0
      %985 = vmatpush.bf16.msra.mxu0 0
      %986 = vmatpush.bf16.msra.mxu0 0
      %987 = vmatpush.bf16.msra.mxu0 0
      %988 = vmatpush.bf16.msra.mxu0 0
      %989 = vmatpush.bf16.msra.mxu0 0
      %990 = vmatpush.bf16.msra.mxu0 0
      %991 = vmatpush.bf16.msra.mxu0 %v982
      %992 = vmatmul.bf16.gmra.mxu0 %v979
      %v993 = vpop.f32.mrf.mxu0
      %v994 = vadd.f32 0.0, %v993
      %v995 = vpop.f32.mrf.mxu0
      %996 = vdwg.mxu0
      %v998 = vsel %vm731, %v976, 0
      %v1001 = vsel %vm773, %v727, 0
      %1003 = vmatpush.bf16.msra.mxu0 0
      %1004 = vmatpush.bf16.msra.mxu0 0
      %1005 = vmatpush.bf16.msra.mxu0 0
      %1006 = vmatpush.bf16.msra.mxu0 0
      %1007 = vmatpush.bf16.msra.mxu0 0
      %1008 = vmatpush.bf16.msra.mxu0 0
      %1009 = vmatpush.bf16.msra.mxu0 0
      %1010 = vmatpush.bf16.msra.mxu0 %v1001
      %1011 = vmatmul.bf16.gmra.mxu0 %v998
      %v1012 = vpop.f32.mrf.mxu0
      %v1013 = vadd.f32 %v994, %v1012
      %v1014 = vpop.f32.mrf.mxu0
      %1015 = vdwg.mxu0
      %v1016 = vpack.c.bf16 %v912, %v912
      %v1018 = vsel %vm731, %v1016, 0
      %v1021 = vsel %vm773, %v729, 0
      %1023 = vmatpush.bf16.msra.mxu0 0
      %1024 = vmatpush.bf16.msra.mxu0 0
      %1025 = vmatpush.bf16.msra.mxu0 0
      %1026 = vmatpush.bf16.msra.mxu0 0
      %1027 = vmatpush.bf16.msra.mxu0 0
      %1028 = vmatpush.bf16.msra.mxu0 0
      %1029 = vmatpush.bf16.msra.mxu0 0
      %1030 = vmatpush.bf16.msra.mxu0 %v1021
      %1031 = vmatmul.bf16.gmra.mxu0 %v1018
      %v1032 = vpop.f32.mrf.mxu0
      %v1033 = vadd.f32 0.0, %v1032
      %v1034 = vpop.f32.mrf.mxu0
      %1035 = vdwg.mxu0
      %v1036 = vadd.f32 %v1013, %v1033
      %v1037 = vpack.c.bf16 %v973, %v973
      %v1039 = vsel %vm731, %v1037, 0
      %v1042 = vsel %vm773, %v730, 0
      %1044 = vmatpush.bf16.msra.mxu0 0
      %1045 = vmatpush.bf16.msra.mxu0 0
      %1046 = vmatpush.bf16.msra.mxu0 0
      %1047 = vmatpush.bf16.msra.mxu0 0
      %1048 = vmatpush.bf16.msra.mxu0 0
      %1049 = vmatpush.bf16.msra.mxu0 0
      %1050 = vmatpush.bf16.msra.mxu0 0
      %1051 = vmatpush.bf16.msra.mxu0 %v1042
      %1052 = vmatmul.bf16.gmra.mxu0 %v1039
      %v1053 = vpop.f32.mrf.mxu0
      %v1054 = vadd.f32 0.0, %v1053
      %v1055 = vpop.f32.mrf.mxu0
      %1056 = vdwg.mxu0
      %v1057 = vadd.f32 %v1036, %v1054
      %v1058 = vld [vmem:[#allocation2] sm:$0xff]
      %v1059 = vadd.f32 %v1058, %v1057
      %1060 = vst.msk [vmem:[#allocation2] sm:$0xff] %vm506, %v1059
      // Predicated region
      $region69: #{_lambda_.5} parent=63 // pred_check
        %p1061 = pneg %p475
      $region70: #{_lambda_.5} parent=63 // pred_check_branch
        %1063 = sbr.rel (%p1061) target = $region72
      $region71: #{_lambda_.5} parent=63 // pred_region
        %v1064 = vld [vmem:[%s449] sm:$0xf]
        %v1065 = vunpack.c.l.bf16 %v1064
        %v1066 = vld [vmem:[%s10] sm:$0x1]
        %v1067 = vand.u32 2147483647, %v1066
        %v1068 = vld [vmem:[#allocation2] sm:$0xff]
        %v1069 = vmul.f32 %v1068, %v1068
        %v1070 = vsel %vm506, %v1069, 0.0
        %1071 = vadd.xlane.f32.xlu0 %v1070
        %v1072 = vpop.xlane.xlu0 %1071
        %v1073 = vmax.f32 %v1072, 1e-24
        %v1074 = vrsqrt.pop %v1073
        %v1075 = vmul.f32 %v1074, %v1073
        %v1076 = vmul.f32 %v1075, %v1074
        %v1077 = vmul.f32 0.5, %v1076
        %v1078 = vsub.f32 1.5, %v1077
        %v1079 = vmul.f32 %v1074, %v1078
        %vm1080 = vweird.f32 %v1073
        %vm1081 = vweird.f32 %v1074
        %vm1082 = vmor %vm1080, %vm1081
        %v1083 = vsel %vm1082, %v1074, %v1079
        %v1084 = vmul.f32 %v1068, %v1083
        %v1085 = vsub.f32 %v1084, %v1065
        %v1087 = vperm.slane %v1067, 0
        %v1089 = vmul.f32 %v1087, %v1085
        %v1090 = vadd.f32 %v1065, %v1089
        %v1091 = vmul.f32 %v1090, %v1090
        %v1092 = vsel %vm506, %v1091, 0.0
        %1093 = vadd.xlane.f32.xlu0 %v1092
        %v1094 = vpop.xlane.xlu0 %1093
        %v1095 = vmax.f32 %v1094, 1e-24
        %v1096 = vrsqrt.pop %v1095
        %v1097 = vmul.f32 %v1096, %v1095
        %v1098 = vmul.f32 %v1097, %v1096
        %v1099 = vmul.f32 0.5, %v1098
        %v1100 = vsub.f32 1.5, %v1099
        %v1101 = vmul.f32 %v1096, %v1100
        %vm1102 = vweird.f32 %v1095
        %vm1103 = vweird.f32 %v1096
        %vm1104 = vmor %vm1102, %vm1103
        %v1105 = vsel %vm1104, %v1096, %v1101
        %v1106 = vmul.f32 %v1090, %v1105
        %v1107 = vpack.c.bf16 %v1106, %v1106
        %vm1108 = vcmask 257024
        %1109 = vst.msk [vmem:[%s473] sm:$0xf] %vm1108, %v1107
      $region72: #{_lambda_.5} parent=63 // pred_fallthru
        _
      %p1110 = scmp.lt.s32.totalorder %s26, 1
      %s1111 = scalar_select %p1110, %s26, 1
      %s1112 = smul.addr %s1111, 4
      %s1113 = scalar_lea.vmem %s11, %s1112
      // Predicated region
      $region73: #{_lambda_.5} parent=63 // pred_check
        %p1114 = pneg %p308
      $region74: #{_lambda_.5} parent=63 // pred_check_branch
        %1116 = sbr.rel (%p1114) target = $region76
      $region75: #{_lambda_.5} parent=63 // pred_region
        _
      $region76: #{_lambda_.5} parent=63 // pred_fallthru
        _
    $region64: #{_lambda_.5} parent=5 // pred_fallthru
      _
    %p1117 = scmp.le.s32.totalorder 2, %s17
    // Predicated region
    $region77: #{_lambda_.5} parent=5 // pred_check
      %p1118 = pneg %p1117
    $region78: #{_lambda_.5} parent=5 // pred_check_branch
      %1120 = sbr.rel (%p1118) target = $region80
    $region79: #{_lambda_.5} parent=5 // pred_region
      %s1121 = ssub.s32 %s17, 2
      // Predicated region
      $region81: #{_lambda_.5} parent=79 // pred_check
        %p1122 = pneg %p314
      $region82: #{_lambda_.5} parent=79 // pred_check_branch
        %1124 = sbr.rel (%p1122) target = $region84
      $region83: #{_lambda_.5} parent=79 // pred_region
        %p1125 = scmp.lt.s32.totalorder %s28, 1
        %s1126 = scalar_select %p1125, %s28, 1
        %s1127 = smul.addr %s1126, 4
        %s1128 = scalar_lea.vmem %s11, %s1127
      $region84: #{_lambda_.5} parent=79 // pred_fallthru
        _
    $region80: #{_lambda_.5} parent=5 // pred_fallthru
      _
  $region6: #{_lambda_.5} parent=0 // loop_footer
    %s21 = sadd.s32 1, %s17
  $region7: #{_lambda_.5} parent=0 // loop_footer_branch
    %16 = sbr.rel target = $region3
  $region8: #{_lambda_.5} parent=0 // loop_exit
    _

</llo_original>
